<compile_context>
chip_gen: v5e
topology: v5e:2x2
jax: 0.10.0
libtpu: 0.0.40
codegen_flags: <defaults>
</compile_context>

<pallas_src>
import math

import jax
import jax.numpy as jnp
from jax.experimental import pallas as pl
from jax.experimental.pallas import tpu as pltpu

HIDDEN = 32
N_HEADS = 4
HEAD_DIM = HIDDEN // N_HEADS
FFN = 64
N_LAYERS = 2
VOCAB = 100
MAX_POS = 16
NUM_LABELS = 10
LOGIT_PAD = 128            # lane-dense classifier output; sliced back to NUM_LABELS
LN_EPS = 1e-12             # DistilBERT LayerNorm eps


# ----------------------------- in-kernel helpers -----------------------------

def _layer_norm(x, g, b):
    mu = jnp.mean(x, axis=-1, keepdims=True)
    var = jnp.mean(jnp.square(x - mu), axis=-1, keepdims=True)
    return (x - mu) * jax.lax.rsqrt(var + LN_EPS) * g + b


# -------------------------------- fused kernel --------------------------------

def _make_kernel(B, S):
    BS = B * S

    def kernel(x_ref, mbias_ref, embg_ref, embb_ref,
               wqkv_ref, bqkv_ref, wo_ref, bo_ref, ln1g_ref, ln1b_ref,
               w1_ref, b1_ref, w2_ref, b2_ref, ln2g_ref, ln2b_ref,
               clsw_ref, clsb_ref, o_ref, act_ref):
        layer = pl.program_id(0)

        # Embedding LayerNorm once (dropout is identity at inference time).
        @pl.when(layer == 0)
        def _():
            act_ref[...] = _layer_norm(x_ref[...], embg_ref[...], embb_ref[...])

        x = act_ref[...]           # (B*S, H) f32, resident across layers
        mbias = mbias_ref[...]     # (B, 1, S) additive key mask (0 / -1e9)

        # ---------------- attention ----------------
        # One whole-batch QKV matmul; 1/sqrt(HEAD_DIM) already folded into Wq/bq.
        qkv = jnp.dot(x, wqkv_ref[0],
                      preferred_element_type=jnp.float32) + bqkv_ref[0]   # (B*S, 3H)

        ctx_heads = []
        for h in range(N_HEADS):   # static; scores/ctx are per-(batch, head) by nature
            lo = h * HEAD_DIM
            q = qkv[:, lo:lo + HEAD_DIM].reshape(B, S, HEAD_DIM)
            k = qkv[:, HIDDEN + lo:HIDDEN + lo + HEAD_DIM].reshape(B, S, HEAD_DIM)
            v = qkv[:, 2 * HIDDEN + lo:2 * HIDDEN + lo + HEAD_DIM].reshape(B, S, HEAD_DIM)
            s = jnp.einsum('bqd,bkd->bqk', q, k,
                           preferred_element_type=jnp.float32) + mbias    # (B, S, S)
            m = jnp.max(s, axis=-1, keepdims=True)
            p = jnp.exp(s - m)
            p = p * pl.reciprocal(jnp.sum(p, axis=-1, keepdims=True), approx=True)
            ctx_heads.append(jnp.einsum('bqk,bkd->bqd', p, v,
                                        preferred_element_type=jnp.float32))
        # Heads on lanes -> single output-projection matmul with K = HIDDEN.
        ctx = jnp.concatenate(ctx_heads, axis=-1).reshape(BS, HIDDEN)

        attn = jnp.dot(ctx, wo_ref[0],
                       preferred_element_type=jnp.float32) + bo_ref[0]    # (B*S, H)
        h1 = _layer_norm(attn + x, ln1g_ref[0], ln1b_ref[0])

        # ---------------- feed-forward ----------------
        # TODO(synk): HF DistilBERT uses exact erf-GELU; tanh approximation used here.
        ff = jax.nn.gelu(
            jnp.dot(h1, w1_ref[0], preferred_element_type=jnp.float32) + b1_ref[0],
            approximate=True)
        ff = jnp.dot(ff, w2_ref[0], preferred_element_type=jnp.float32) + b2_ref[0]
        x_out = _layer_norm(ff + h1, ln2g_ref[0], ln2b_ref[0])
        act_ref[...] = x_out

        # ---------------- classifier head (last layer only) ----------------
        @pl.when(layer == pl.num_programs(0) - 1)
        def _():
            cls = x_out.reshape(B, S, HIDDEN)[:, 0, :]          # CLS row of each sequence
            logits = (jnp.dot(cls, clsw_ref[...], preferred_element_type=jnp.float32)
                      + clsb_ref[...])                          # (B, LOGIT_PAD)
            o_ref[...] = logits.astype(o_ref.dtype)

    return kernel


# --------------------------- one-time weight packing ---------------------------

def _pack_layer(p, scale):
    """(in,out)-convention weights; x @ W.  Fold softmax scale into Wq/bq, fuse QKV."""
    wqkv = jnp.concatenate([p["wq"] * scale, p["wk"], p["wv"]], axis=1)   # (H, 3H)
    bqkv = jnp.concatenate([p["bq"] * scale, p["bk"], p["bv"]]).reshape(1, 3 * HIDDEN)
    return dict(
        wqkv=wqkv, bqkv=bqkv,
        wo=p["wo"], bo=p["bo"].reshape(1, HIDDEN),
        ln1g=p["ln1_g"].reshape(1, HIDDEN), ln1b=p["ln1_b"].reshape(1, HIDDEN),
        w1=p["w1"], b1=p["b1"].reshape(1, FFN),
        w2=p["w2"], b2=p["b2"].reshape(1, HIDDEN),
        ln2g=p["ln2_g"].reshape(1, HIDDEN), ln2b=p["ln2_b"].reshape(1, HIDDEN),
    )


def pack_params(params):
    """Run ONCE at parameter-load time (hoisted out of the jitted forward).

    Stacks per-layer weights along a leading layer axis for grid streaming and pads the
    classifier to a lane-dense 128-wide output.  For the real-size model, cast the packed
    weights to bf16 here to halve weight DMA / VMEM footprint (matmuls accumulate in f32).
    """
    scale = 1.0 / math.sqrt(HEAD_DIM)
    layers = [_pack_layer(lp, scale) for lp in params["layers"]]
    stacked = {k: jnp.stack([l[k] for l in layers], axis=0) for k in layers[0]}
    return {
        "word_emb": params["word_emb"].astype(jnp.float32),
        "pos_emb": params["pos_emb"].astype(jnp.float32),
        "emb_ln_g": params["emb_ln_g"].reshape(1, HIDDEN).astype(jnp.float32),
        "emb_ln_b": params["emb_ln_b"].reshape(1, HIDDEN).astype(jnp.float32),
        "cls_w": jnp.pad(params["cls_w"],
                         ((0, 0), (0, LOGIT_PAD - NUM_LABELS))).astype(jnp.float32),
        "cls_b": jnp.pad(params["cls_b"],
                         (0, LOGIT_PAD - NUM_LABELS)).reshape(1, LOGIT_PAD).astype(jnp.float32),
        "layers": stacked,
    }


# ------------------------------ pallas wrapper ---------------------------------

@jax.jit
def smiles_classifier_forward(packed, input_ids, attention_mask):
    """Equivalent of SmilesClassifier.forward (eval mode: dropout = identity)."""
    B, S = input_ids.shape
    # Embedding gather + position embeddings: plain JAX glue (gather has no clean
    # tile-based BlockSpec form at this size).
    emb = (jnp.take(packed["word_emb"], input_ids, axis=0)
           + packed["pos_emb"][None, :S, :])
    x_flat = emb.reshape(B * S, HIDDEN).astype(jnp.float32)

    # Additive attention-mask bias: 0 for valid tokens, -1e9 for padding keys.
    mbias = ((1.0 - attention_mask.astype(jnp.float32)) * -1e9).reshape(B, 1, S)

    lw = packed["layers"]

    def resident(arr):          # same block every grid step -> fetched once, stays in VMEM
        nd = arr.ndim
        return pl.BlockSpec(arr.shape, lambda l, nd=nd: (0,) * nd)

    def per_layer(arr):         # leading layer axis selected by grid index -> streamed
        nd = arr.ndim
        return pl.BlockSpec((1,) + arr.shape[1:], lambda l, nd=nd: (l,) + (0,) * (nd - 1))

    layer_keys = ("wqkv", "bqkv", "wo", "bo", "ln1g", "ln1b",
                  "w1", "b1", "w2", "b2", "ln2g", "ln2b")

    inputs = ([x_flat, mbias, packed["emb_ln_g"], packed["emb_ln_b"]]
              + [lw[k] for k in layer_keys]
              + [packed["cls_w"], packed["cls_b"]])

    in_specs = ([resident(x_flat), resident(mbias),
                 resident(packed["emb_ln_g"]), resident(packed["emb_ln_b"])]
                + [per_layer(lw[k]) for k in layer_keys]
                + [resident(packed["cls_w"]), resident(packed["cls_b"])])

    logits_pad = pl.pallas_call(
        _make_kernel(B, S),
        out_shape=jax.ShapeDtypeStruct((B, LOGIT_PAD), jnp.float32),
        grid_spec=pltpu.PrefetchScalarGridSpec(
            num_scalar_prefetch=0,
            grid=(N_LAYERS,),
            in_specs=in_specs,
            out_specs=pl.BlockSpec((B, LOGIT_PAD), lambda l: (0, 0)),
            scratch_shapes=[pltpu.VMEM((B * S, HIDDEN), jnp.float32)]),
        compiler_params=pltpu.CompilerParams(
            # Layer axis is a sequential carry over the activation scratch.
            dimension_semantics=("arbitrary",),
            vmem_limit_bytes=64 * 1024 * 1024),
    )(*inputs)

    return logits_pad[:, :NUM_LABELS]


def smiles_classifier_predict(packed, input_ids, attention_mask, multi_label=True):
    logits = smiles_classifier_forward(packed, input_ids, attention_mask)
    if multi_label:
        return (jax.nn.sigmoid(logits) > 0.5).astype(jnp.int32)
    return jnp.argmax(jax.nn.softmax(logits, axis=1), axis=1)


# ------------------------------- param init -----------------------------------

def init_params(key):
    keys = iter(jax.random.split(key, 64))

    def nrm(shape, scale=0.02):
        return (scale * jax.random.normal(next(keys), shape)).astype(jnp.float32)

    params = {
        "word_emb": nrm((VOCAB, HIDDEN)),
        "pos_emb": nrm((MAX_POS, HIDDEN)),
        "emb_ln_g": jnp.ones((HIDDEN,), jnp.float32),
        "emb_ln_b": jnp.zeros((HIDDEN,), jnp.float32),
        "cls_w": nrm((HIDDEN, NUM_LABELS)),
        "cls_b": jnp.zeros((NUM_LABELS,), jnp.float32),
        "layers": [],
    }
    for _ in range(N_LAYERS):
        params["layers"].append({
            "wq": nrm((HIDDEN, HIDDEN)), "bq": jnp.zeros((HIDDEN,), jnp.float32),
            "wk": nrm((HIDDEN, HIDDEN)), "bk": jnp.zeros((HIDDEN,), jnp.float32),
            "wv": nrm((HIDDEN, HIDDEN)), "bv": jnp.zeros((HIDDEN,), jnp.float32),
            "wo": nrm((HIDDEN, HIDDEN)), "bo": jnp.zeros((HIDDEN,), jnp.float32),
            "ln1_g": jnp.ones((HIDDEN,), jnp.float32),
            "ln1_b": jnp.zeros((HIDDEN,), jnp.float32),
            "w1": nrm((HIDDEN, FFN)), "b1": jnp.zeros((FFN,), jnp.float32),
            "w2": nrm((FFN, HIDDEN)), "b2": jnp.zeros((HIDDEN,), jnp.float32),
            "ln2_g": jnp.ones((HIDDEN,), jnp.float32),
            "ln2_b": jnp.zeros((HIDDEN,), jnp.float32),
        })
    return params


if __name__ == "__main__":
    key = jax.random.PRNGKey(0)
    pkey, ikey = jax.random.split(key)
    params = init_params(pkey)
    packed = pack_params(params)       # one-time repack, outside the jitted forward

    B, S = 2, 8
    input_ids = jax.random.randint(ikey, (B, S), 0, VOCAB, dtype=jnp.int32)
    attention_mask = jnp.array([[1, 1, 1, 1, 1, 1, 1, 1],
                                [1, 1, 1, 1, 1, 0, 0, 0]], dtype=jnp.int32)

    logits = smiles_classifier_forward(packed, input_ids, attention_mask)
    jax.block_until_ready(logits)
    assert logits.shape == (B, NUM_LABELS)

    preds = smiles_classifier_predict(packed, input_ids, attention_mask, multi_label=True)
    jax.block_until_ready(preds)
    assert preds.shape == (B, NUM_LABELS)

    print("KERNEL_OK")
</pallas_src>

<mosaic_0001>
module attributes {stable_mosaic.version = 11 : i64} {
  func.func @kernel(%arg0: i32, %arg1: memref<16x32xf32, #tpu.memory_space<vmem>>, %arg2: memref<2x1x8xf32, #tpu.memory_space<vmem>>, %arg3: memref<1x32xf32, #tpu.memory_space<vmem>>, %arg4: memref<1x32xf32, #tpu.memory_space<vmem>>, %arg5: memref<1x32x96xf32, #tpu.memory_space<vmem>>, %arg6: memref<1x1x96xf32, #tpu.memory_space<vmem>>, %arg7: memref<1x32x32xf32, #tpu.memory_space<vmem>>, %arg8: memref<1x1x32xf32, #tpu.memory_space<vmem>>, %arg9: memref<1x1x32xf32, #tpu.memory_space<vmem>>, %arg10: memref<1x1x32xf32, #tpu.memory_space<vmem>>, %arg11: memref<1x32x64xf32, #tpu.memory_space<vmem>>, %arg12: memref<1x1x64xf32, #tpu.memory_space<vmem>>, %arg13: memref<1x64x32xf32, #tpu.memory_space<vmem>>, %arg14: memref<1x1x32xf32, #tpu.memory_space<vmem>>, %arg15: memref<1x1x32xf32, #tpu.memory_space<vmem>>, %arg16: memref<1x1x32xf32, #tpu.memory_space<vmem>>, %arg17: memref<32x128xf32, #tpu.memory_space<vmem>>, %arg18: memref<1x128xf32, #tpu.memory_space<vmem>>, %arg19: memref<2x128xf32, #tpu.memory_space<vmem>>, %arg20: memref<16x32xf32, #tpu.memory_space<vmem>>) attributes {dimension_semantics = [#tpu.dimension_semantics<arbitrary>], iteration_bounds = array<i64: 2>, scalar_prefetch = 0 : i64, scratch_operands = 1 : i64, tpu.core_type = #tpu.core_type<tc>, window_params = [{pipeline_mode = #tpu.pipeline_mode<synchronous>, transform_indices = @transform_0, window_bounds = array<i64: 16, 32>}, {pipeline_mode = #tpu.pipeline_mode<synchronous>, transform_indices = @transform_1, window_bounds = array<i64: 2, 1, 8>}, {pipeline_mode = #tpu.pipeline_mode<synchronous>, transform_indices = @transform_2, window_bounds = array<i64: 1, 32>}, {pipeline_mode = #tpu.pipeline_mode<synchronous>, transform_indices = @transform_3, window_bounds = array<i64: 1, 32>}, {transform_indices = @transform_4, window_bounds = array<i64: 1, 32, 96>}, {transform_indices = @transform_5, window_bounds = array<i64: 1, 1, 96>}, {transform_indices = @transform_6, window_bounds = array<i64: 1, 32, 32>}, {transform_indices = @transform_7, window_bounds = array<i64: 1, 1, 32>}, {transform_indices = @transform_8, window_bounds = array<i64: 1, 1, 32>}, {transform_indices = @transform_9, window_bounds = array<i64: 1, 1, 32>}, {transform_indices = @transform_10, window_bounds = array<i64: 1, 32, 64>}, {transform_indices = @transform_11, window_bounds = array<i64: 1, 1, 64>}, {transform_indices = @transform_12, window_bounds = array<i64: 1, 64, 32>}, {transform_indices = @transform_13, window_bounds = array<i64: 1, 1, 32>}, {transform_indices = @transform_14, window_bounds = array<i64: 1, 1, 32>}, {transform_indices = @transform_15, window_bounds = array<i64: 1, 1, 32>}, {pipeline_mode = #tpu.pipeline_mode<synchronous>, transform_indices = @transform_16, window_bounds = array<i64: 32, 128>}, {pipeline_mode = #tpu.pipeline_mode<synchronous>, transform_indices = @transform_17, window_bounds = array<i64: 1, 128>}, {pipeline_mode = #tpu.pipeline_mode<synchronous>, transform_indices = @transform_18, window_bounds = array<i64: 2, 128>}]} {
    %c0_i32 = arith.constant 0 : i32
    %0 = arith.cmpi eq, %arg0, %c0_i32 : i32
    %1 = arith.extui %0 : i1 to i32
    %c0_i32_0 = arith.constant 0 : i32
    %2 = arith.cmpi ne, %1, %c0_i32_0 : i32
    scf.if %2 {
      %c0_77 = arith.constant 0 : index
      %c0_78 = arith.constant 0 : index
      %186 = vector.load %arg1[%c0_77, %c0_78] : memref<16x32xf32, #tpu.memory_space<vmem>>, vector<16x32xf32>
      %c0_79 = arith.constant 0 : index
      %c0_80 = arith.constant 0 : index
      %187 = vector.load %arg3[%c0_79, %c0_80] : memref<1x32xf32, #tpu.memory_space<vmem>>, vector<1x32xf32>
      %c0_81 = arith.constant 0 : index
      %c0_82 = arith.constant 0 : index
      %188 = vector.load %arg4[%c0_81, %c0_82] : memref<1x32xf32, #tpu.memory_space<vmem>>, vector<1x32xf32>
      %cst_83 = arith.constant dense<0.000000e+00> : vector<16xf32>
      %189 = vector.multi_reduction <add>, %186, %cst_83 [1] : vector<16x32xf32> to vector<16xf32>
      %190 = vector.shape_cast %189 : vector<16xf32> to vector<16x1xf32>
      %cst_84 = arith.constant 3.200000e+01 : f32
      %191 = vector.broadcast %cst_84 : f32 to vector<16x1xf32>
      %192 = arith.divf %190, %191 : vector<16x1xf32>
      %193 = vector.broadcast %192 : vector<16x1xf32> to vector<16x32xf32>
      %194 = arith.subf %186, %193 : vector<16x32xf32>
      %195 = arith.mulf %194, %194 : vector<16x32xf32>
      %cst_85 = arith.constant dense<0.000000e+00> : vector<16xf32>
      %196 = vector.multi_reduction <add>, %195, %cst_85 [1] : vector<16x32xf32> to vector<16xf32>
      %197 = vector.shape_cast %196 : vector<16xf32> to vector<16x1xf32>
      %cst_86 = arith.constant 3.200000e+01 : f32
      %198 = vector.broadcast %cst_86 : f32 to vector<16x1xf32>
      %199 = arith.divf %197, %198 : vector<16x1xf32>
      %200 = vector.broadcast %192 : vector<16x1xf32> to vector<16x32xf32>
      %201 = arith.subf %186, %200 : vector<16x32xf32>
      %cst_87 = arith.constant 9.99999996E-13 : f32
      %202 = vector.broadcast %cst_87 : f32 to vector<16x1xf32>
      %203 = arith.addf %199, %202 : vector<16x1xf32>
      %204 = math.rsqrt %203 : vector<16x1xf32>
      %205 = vector.broadcast %204 : vector<16x1xf32> to vector<16x32xf32>
      %206 = arith.mulf %201, %205 : vector<16x32xf32>
      %207 = vector.broadcast %187 : vector<1x32xf32> to vector<16x32xf32>
      %208 = arith.mulf %206, %207 : vector<16x32xf32>
      %209 = vector.broadcast %188 : vector<1x32xf32> to vector<16x32xf32>
      %210 = arith.addf %208, %209 : vector<16x32xf32>
      %c0_88 = arith.constant 0 : index
      %c0_89 = arith.constant 0 : index
      %211 = vector.load %arg20[%c0_88, %c0_89] : memref<16x32xf32, #tpu.memory_space<vmem>>, vector<16x32xf32>
      tpu.vector_store %arg20[%c0_88, %c0_89], %210 {strides = array<i32>} : memref<16x32xf32, #tpu.memory_space<vmem>>, vector<16x32xf32>,
    } else {
    }
    %c0 = arith.constant 0 : index
    %c0_1 = arith.constant 0 : index
    %3 = vector.load %arg20[%c0, %c0_1] : memref<16x32xf32, #tpu.memory_space<vmem>>, vector<16x32xf32>
    %c0_2 = arith.constant 0 : index
    %c0_3 = arith.constant 0 : index
    %c0_4 = arith.constant 0 : index
    %4 = vector.load %arg2[%c0_2, %c0_3, %c0_4] : memref<2x1x8xf32, #tpu.memory_space<vmem>>, vector<2x1x8xf32>
    %c0_5 = arith.constant 0 : index
    %c0_6 = arith.constant 0 : index
    %c0_7 = arith.constant 0 : index
    %5 = vector.load %arg5[%c0_5, %c0_6, %c0_7] : memref<1x32x96xf32, #tpu.memory_space<vmem>>, vector<1x32x96xf32>
    %6 = vector.shape_cast %5 : vector<1x32x96xf32> to vector<32x96xf32>
    %cst = arith.constant dense<0.000000e+00> : vector<16x96xf32>
    %7 = tpu.matmul %3, %6, %cst {dimension_numbers = #tpu.dot_dimension_numbers<[1], [0], [0], [1], [0, 0, 1, 1], [], []>} : vector<16x32xf32>, vector<32x96xf32>, vector<16x96xf32> -> vector<16x96xf32>
    %c0_8 = arith.constant 0 : index
    %c0_9 = arith.constant 0 : index
    %c0_10 = arith.constant 0 : index
    %8 = vector.load %arg6[%c0_8, %c0_9, %c0_10] : memref<1x1x96xf32, #tpu.memory_space<vmem>>, vector<1x1x96xf32>
    %9 = vector.shape_cast %8 : vector<1x1x96xf32> to vector<1x96xf32>
    %10 = vector.broadcast %9 : vector<1x96xf32> to vector<16x96xf32>
    %11 = arith.addf %7, %10 : vector<16x96xf32>
    %12 = vector.extract_strided_slice %11 {offsets = [0, 0], sizes = [16, 8], strides = [1, 1]} : vector<16x96xf32> to vector<16x8xf32>
    %13 = vector.shape_cast %12 : vector<16x8xf32> to vector<2x8x8xf32>
    %14 = vector.extract_strided_slice %11 {offsets = [0, 32], sizes = [16, 8], strides = [1, 1]} : vector<16x96xf32> to vector<16x8xf32>
    %15 = vector.shape_cast %14 : vector<16x8xf32> to vector<2x8x8xf32>
    %16 = vector.extract_strided_slice %11 {offsets = [0, 64], sizes = [16, 8], strides = [1, 1]} : vector<16x96xf32> to vector<16x8xf32>
    %17 = vector.shape_cast %16 : vector<16x8xf32> to vector<2x8x8xf32>
    "tpu.trace_start"() <{level = 10 : i32, message = "bqd,bkd->bqk"}> : () -> ()
    %cst_11 = arith.constant dense<0.000000e+00> : vector<2x8x8xf32>
    %18 = tpu.matmul %13, %15, %cst_11 {dimension_numbers = #tpu.dot_dimension_numbers<[2], [2], [1], [1], [0, 0, 0, 1, 1, 1], [0], [0]>} : vector<2x8x8xf32>, vector<2x8x8xf32>, vector<2x8x8xf32> -> vector<2x8x8xf32>
    "tpu.trace_stop"() : () -> ()
    %19 = vector.broadcast %4 : vector<2x1x8xf32> to vector<2x8x8xf32>
    %20 = arith.addf %18, %19 : vector<2x8x8xf32>
    %cst_12 = arith.constant dense<0xFF800000> : vector<2x8xf32>
    %21 = vector.multi_reduction <maximumf>, %20, %cst_12 [2] : vector<2x8x8xf32> to vector<2x8xf32>
    %22 = vector.shape_cast %21 : vector<2x8xf32> to vector<2x8x1xf32>
    %23 = vector.broadcast %22 : vector<2x8x1xf32> to vector<2x8x8xf32>
    %24 = arith.subf %20, %23 : vector<2x8x8xf32>
    %25 = math.exp %24 : vector<2x8x8xf32>
    %cst_13 = arith.constant dense<0.000000e+00> : vector<2x8xf32>
    %26 = vector.multi_reduction <add>, %25, %cst_13 [2] : vector<2x8x8xf32> to vector<2x8xf32>
    %27 = vector.shape_cast %26 : vector<2x8xf32> to vector<2x8x1xf32>
    %28 = tpu.reciprocal %27 {approx = true} : vector<2x8x1xf32> -> vector<2x8x1xf32>
    %29 = vector.broadcast %28 : vector<2x8x1xf32> to vector<2x8x8xf32>
    %30 = arith.mulf %25, %29 : vector<2x8x8xf32>
    "tpu.trace_start"() <{level = 10 : i32, message = "bqk,bkd->bqd"}> : () -> ()
    %cst_14 = arith.constant dense<0.000000e+00> : vector<2x8x8xf32>
    %31 = tpu.matmul %30, %17, %cst_14 {dimension_numbers = #tpu.dot_dimension_numbers<[2], [1], [1], [2], [0, 0, 0, 1, 1, 2], [0], [0]>} : vector<2x8x8xf32>, vector<2x8x8xf32>, vector<2x8x8xf32> -> vector<2x8x8xf32>
    "tpu.trace_stop"() : () -> ()
    %32 = vector.extract_strided_slice %11 {offsets = [0, 8], sizes = [16, 8], strides = [1, 1]} : vector<16x96xf32> to vector<16x8xf32>
    %33 = vector.shape_cast %32 : vector<16x8xf32> to vector<2x8x8xf32>
    %34 = vector.extract_strided_slice %11 {offsets = [0, 40], sizes = [16, 8], strides = [1, 1]} : vector<16x96xf32> to vector<16x8xf32>
    %35 = vector.shape_cast %34 : vector<16x8xf32> to vector<2x8x8xf32>
    %36 = vector.extract_strided_slice %11 {offsets = [0, 72], sizes = [16, 8], strides = [1, 1]} : vector<16x96xf32> to vector<16x8xf32>
    %37 = vector.shape_cast %36 : vector<16x8xf32> to vector<2x8x8xf32>
    "tpu.trace_start"() <{level = 10 : i32, message = "bqd,bkd->bqk"}> : () -> ()
    %cst_15 = arith.constant dense<0.000000e+00> : vector<2x8x8xf32>
    %38 = tpu.matmul %33, %35, %cst_15 {dimension_numbers = #tpu.dot_dimension_numbers<[2], [2], [1], [1], [0, 0, 0, 1, 1, 1], [0], [0]>} : vector<2x8x8xf32>, vector<2x8x8xf32>, vector<2x8x8xf32> -> vector<2x8x8xf32>
    "tpu.trace_stop"() : () -> ()
    %39 = vector.broadcast %4 : vector<2x1x8xf32> to vector<2x8x8xf32>
    %40 = arith.addf %38, %39 : vector<2x8x8xf32>
    %cst_16 = arith.constant dense<0xFF800000> : vector<2x8xf32>
    %41 = vector.multi_reduction <maximumf>, %40, %cst_16 [2] : vector<2x8x8xf32> to vector<2x8xf32>
    %42 = vector.shape_cast %41 : vector<2x8xf32> to vector<2x8x1xf32>
    %43 = vector.broadcast %42 : vector<2x8x1xf32> to vector<2x8x8xf32>
    %44 = arith.subf %40, %43 : vector<2x8x8xf32>
    %45 = math.exp %44 : vector<2x8x8xf32>
    %cst_17 = arith.constant dense<0.000000e+00> : vector<2x8xf32>
    %46 = vector.multi_reduction <add>, %45, %cst_17 [2] : vector<2x8x8xf32> to vector<2x8xf32>
    %47 = vector.shape_cast %46 : vector<2x8xf32> to vector<2x8x1xf32>
    %48 = tpu.reciprocal %47 {approx = true} : vector<2x8x1xf32> -> vector<2x8x1xf32>
    %49 = vector.broadcast %48 : vector<2x8x1xf32> to vector<2x8x8xf32>
    %50 = arith.mulf %45, %49 : vector<2x8x8xf32>
    "tpu.trace_start"() <{level = 10 : i32, message = "bqk,bkd->bqd"}> : () -> ()
    %cst_18 = arith.constant dense<0.000000e+00> : vector<2x8x8xf32>
    %51 = tpu.matmul %50, %37, %cst_18 {dimension_numbers = #tpu.dot_dimension_numbers<[2], [1], [1], [2], [0, 0, 0, 1, 1, 2], [0], [0]>} : vector<2x8x8xf32>, vector<2x8x8xf32>, vector<2x8x8xf32> -> vector<2x8x8xf32>
    "tpu.trace_stop"() : () -> ()
    %52 = vector.extract_strided_slice %11 {offsets = [0, 16], sizes = [16, 8], strides = [1, 1]} : vector<16x96xf32> to vector<16x8xf32>
    %53 = vector.shape_cast %52 : vector<16x8xf32> to vector<2x8x8xf32>
    %54 = vector.extract_strided_slice %11 {offsets = [0, 48], sizes = [16, 8], strides = [1, 1]} : vector<16x96xf32> to vector<16x8xf32>
    %55 = vector.shape_cast %54 : vector<16x8xf32> to vector<2x8x8xf32>
    %56 = vector.extract_strided_slice %11 {offsets = [0, 80], sizes = [16, 8], strides = [1, 1]} : vector<16x96xf32> to vector<16x8xf32>
    %57 = vector.shape_cast %56 : vector<16x8xf32> to vector<2x8x8xf32>
    "tpu.trace_start"() <{level = 10 : i32, message = "bqd,bkd->bqk"}> : () -> ()
    %cst_19 = arith.constant dense<0.000000e+00> : vector<2x8x8xf32>
    %58 = tpu.matmul %53, %55, %cst_19 {dimension_numbers = #tpu.dot_dimension_numbers<[2], [2], [1], [1], [0, 0, 0, 1, 1, 1], [0], [0]>} : vector<2x8x8xf32>, vector<2x8x8xf32>, vector<2x8x8xf32> -> vector<2x8x8xf32>
    "tpu.trace_stop"() : () -> ()
    %59 = vector.broadcast %4 : vector<2x1x8xf32> to vector<2x8x8xf32>
    %60 = arith.addf %58, %59 : vector<2x8x8xf32>
    %cst_20 = arith.constant dense<0xFF800000> : vector<2x8xf32>
    %61 = vector.multi_reduction <maximumf>, %60, %cst_20 [2] : vector<2x8x8xf32> to vector<2x8xf32>
    %62 = vector.shape_cast %61 : vector<2x8xf32> to vector<2x8x1xf32>
    %63 = vector.broadcast %62 : vector<2x8x1xf32> to vector<2x8x8xf32>
    %64 = arith.subf %60, %63 : vector<2x8x8xf32>
    %65 = math.exp %64 : vector<2x8x8xf32>
    %cst_21 = arith.constant dense<0.000000e+00> : vector<2x8xf32>
    %66 = vector.multi_reduction <add>, %65, %cst_21 [2] : vector<2x8x8xf32> to vector<2x8xf32>
    %67 = vector.shape_cast %66 : vector<2x8xf32> to vector<2x8x1xf32>
    %68 = tpu.reciprocal %67 {approx = true} : vector<2x8x1xf32> -> vector<2x8x1xf32>
    %69 = vector.broadcast %68 : vector<2x8x1xf32> to vector<2x8x8xf32>
    %70 = arith.mulf %65, %69 : vector<2x8x8xf32>
    "tpu.trace_start"() <{level = 10 : i32, message = "bqk,bkd->bqd"}> : () -> ()
    %cst_22 = arith.constant dense<0.000000e+00> : vector<2x8x8xf32>
    %71 = tpu.matmul %70, %57, %cst_22 {dimension_numbers = #tpu.dot_dimension_numbers<[2], [1], [1], [2], [0, 0, 0, 1, 1, 2], [0], [0]>} : vector<2x8x8xf32>, vector<2x8x8xf32>, vector<2x8x8xf32> -> vector<2x8x8xf32>
    "tpu.trace_stop"() : () -> ()
    %72 = vector.extract_strided_slice %11 {offsets = [0, 24], sizes = [16, 8], strides = [1, 1]} : vector<16x96xf32> to vector<16x8xf32>
    %73 = vector.shape_cast %72 : vector<16x8xf32> to vector<2x8x8xf32>
    %74 = vector.extract_strided_slice %11 {offsets = [0, 56], sizes = [16, 8], strides = [1, 1]} : vector<16x96xf32> to vector<16x8xf32>
    %75 = vector.shape_cast %74 : vector<16x8xf32> to vector<2x8x8xf32>
    %76 = vector.extract_strided_slice %11 {offsets = [0, 88], sizes = [16, 8], strides = [1, 1]} : vector<16x96xf32> to vector<16x8xf32>
    %77 = vector.shape_cast %76 : vector<16x8xf32> to vector<2x8x8xf32>
    "tpu.trace_start"() <{level = 10 : i32, message = "bqd,bkd->bqk"}> : () -> ()
    %cst_23 = arith.constant dense<0.000000e+00> : vector<2x8x8xf32>
    %78 = tpu.matmul %73, %75, %cst_23 {dimension_numbers = #tpu.dot_dimension_numbers<[2], [2], [1], [1], [0, 0, 0, 1, 1, 1], [0], [0]>} : vector<2x8x8xf32>, vector<2x8x8xf32>, vector<2x8x8xf32> -> vector<2x8x8xf32>
    "tpu.trace_stop"() : () -> ()
    %79 = vector.broadcast %4 : vector<2x1x8xf32> to vector<2x8x8xf32>
    %80 = arith.addf %78, %79 : vector<2x8x8xf32>
    %cst_24 = arith.constant dense<0xFF800000> : vector<2x8xf32>
    %81 = vector.multi_reduction <maximumf>, %80, %cst_24 [2] : vector<2x8x8xf32> to vector<2x8xf32>
    %82 = vector.shape_cast %81 : vector<2x8xf32> to vector<2x8x1xf32>
    %83 = vector.broadcast %82 : vector<2x8x1xf32> to vector<2x8x8xf32>
    %84 = arith.subf %80, %83 : vector<2x8x8xf32>
    %85 = math.exp %84 : vector<2x8x8xf32>
    %cst_25 = arith.constant dense<0.000000e+00> : vector<2x8xf32>
    %86 = vector.multi_reduction <add>, %85, %cst_25 [2] : vector<2x8x8xf32> to vector<2x8xf32>
    %87 = vector.shape_cast %86 : vector<2x8xf32> to vector<2x8x1xf32>
    %88 = tpu.reciprocal %87 {approx = true} : vector<2x8x1xf32> -> vector<2x8x1xf32>
    %89 = vector.broadcast %88 : vector<2x8x1xf32> to vector<2x8x8xf32>
    %90 = arith.mulf %85, %89 : vector<2x8x8xf32>
    "tpu.trace_start"() <{level = 10 : i32, message = "bqk,bkd->bqd"}> : () -> ()
    %cst_26 = arith.constant dense<0.000000e+00> : vector<2x8x8xf32>
    %91 = tpu.matmul %90, %77, %cst_26 {dimension_numbers = #tpu.dot_dimension_numbers<[2], [1], [1], [2], [0, 0, 0, 1, 1, 2], [0], [0]>} : vector<2x8x8xf32>, vector<2x8x8xf32>, vector<2x8x8xf32> -> vector<2x8x8xf32>
    "tpu.trace_stop"() : () -> ()
    %92 = tpu.concatenate %31, %51, %71, %91 in 2 : vector<2x8x8xf32>, vector<2x8x8xf32>, vector<2x8x8xf32>, vector<2x8x8xf32> -> vector<2x8x32xf32>
    %93 = vector.shape_cast %92 : vector<2x8x32xf32> to vector<16x32xf32>
    %c0_27 = arith.constant 0 : index
    %c0_28 = arith.constant 0 : index
    %c0_29 = arith.constant 0 : index
    %94 = vector.load %arg7[%c0_27, %c0_28, %c0_29] : memref<1x32x32xf32, #tpu.memory_space<vmem>>, vector<1x32x32xf32>
    %95 = vector.shape_cast %94 : vector<1x32x32xf32> to vector<32x32xf32>
    %cst_30 = arith.constant dense<0.000000e+00> : vector<16x32xf32>
    %96 = tpu.matmul %93, %95, %cst_30 {dimension_numbers = #tpu.dot_dimension_numbers<[1], [0], [0], [1], [0, 0, 1, 1], [], []>} : vector<16x32xf32>, vector<32x32xf32>, vector<16x32xf32> -> vector<16x32xf32>
    %c0_31 = arith.constant 0 : index
    %c0_32 = arith.constant 0 : index
    %c0_33 = arith.constant 0 : index
    %97 = vector.load %arg8[%c0_31, %c0_32, %c0_33] : memref<1x1x32xf32, #tpu.memory_space<vmem>>, vector<1x1x32xf32>
    %98 = vector.shape_cast %97 : vector<1x1x32xf32> to vector<1x32xf32>
    %99 = vector.broadcast %98 : vector<1x32xf32> to vector<16x32xf32>
    %100 = arith.addf %96, %99 : vector<16x32xf32>
    %101 = arith.addf %100, %3 : vector<16x32xf32>
    %c0_34 = arith.constant 0 : index
    %c0_35 = arith.constant 0 : index
    %c0_36 = arith.constant 0 : index
    %102 = vector.load %arg9[%c0_34, %c0_35, %c0_36] : memref<1x1x32xf32, #tpu.memory_space<vmem>>, vector<1x1x32xf32>
    %103 = vector.shape_cast %102 : vector<1x1x32xf32> to vector<1x32xf32>
    %c0_37 = arith.constant 0 : index
    %c0_38 = arith.constant 0 : index
    %c0_39 = arith.constant 0 : index
    %104 = vector.load %arg10[%c0_37, %c0_38, %c0_39] : memref<1x1x32xf32, #tpu.memory_space<vmem>>, vector<1x1x32xf32>
    %105 = vector.shape_cast %104 : vector<1x1x32xf32> to vector<1x32xf32>
    %cst_40 = arith.constant dense<0.000000e+00> : vector<16xf32>
    %106 = vector.multi_reduction <add>, %101, %cst_40 [1] : vector<16x32xf32> to vector<16xf32>
    %107 = vector.shape_cast %106 : vector<16xf32> to vector<16x1xf32>
    %cst_41 = arith.constant 3.200000e+01 : f32
    %108 = vector.broadcast %cst_41 : f32 to vector<16x1xf32>
    %109 = arith.divf %107, %108 : vector<16x1xf32>
    %110 = vector.broadcast %109 : vector<16x1xf32> to vector<16x32xf32>
    %111 = arith.subf %101, %110 : vector<16x32xf32>
    %112 = arith.mulf %111, %111 : vector<16x32xf32>
    %cst_42 = arith.constant dense<0.000000e+00> : vector<16xf32>
    %113 = vector.multi_reduction <add>, %112, %cst_42 [1] : vector<16x32xf32> to vector<16xf32>
    %114 = vector.shape_cast %113 : vector<16xf32> to vector<16x1xf32>
    %cst_43 = arith.constant 3.200000e+01 : f32
    %115 = vector.broadcast %cst_43 : f32 to vector<16x1xf32>
    %116 = arith.divf %114, %115 : vector<16x1xf32>
    %117 = vector.broadcast %109 : vector<16x1xf32> to vector<16x32xf32>
    %118 = arith.subf %101, %117 : vector<16x32xf32>
    %cst_44 = arith.constant 9.99999996E-13 : f32
    %119 = vector.broadcast %cst_44 : f32 to vector<16x1xf32>
    %120 = arith.addf %116, %119 : vector<16x1xf32>
    %121 = math.rsqrt %120 : vector<16x1xf32>
    %122 = vector.broadcast %121 : vector<16x1xf32> to vector<16x32xf32>
    %123 = arith.mulf %118, %122 : vector<16x32xf32>
    %124 = vector.broadcast %103 : vector<1x32xf32> to vector<16x32xf32>
    %125 = arith.mulf %123, %124 : vector<16x32xf32>
    %126 = vector.broadcast %105 : vector<1x32xf32> to vector<16x32xf32>
    %127 = arith.addf %125, %126 : vector<16x32xf32>
    %c0_45 = arith.constant 0 : index
    %c0_46 = arith.constant 0 : index
    %c0_47 = arith.constant 0 : index
    %128 = vector.load %arg11[%c0_45, %c0_46, %c0_47] : memref<1x32x64xf32, #tpu.memory_space<vmem>>, vector<1x32x64xf32>
    %129 = vector.shape_cast %128 : vector<1x32x64xf32> to vector<32x64xf32>
    %cst_48 = arith.constant dense<0.000000e+00> : vector<16x64xf32>
    %130 = tpu.matmul %127, %129, %cst_48 {dimension_numbers = #tpu.dot_dimension_numbers<[1], [0], [0], [1], [0, 0, 1, 1], [], []>} : vector<16x32xf32>, vector<32x64xf32>, vector<16x64xf32> -> vector<16x64xf32>
    %c0_49 = arith.constant 0 : index
    %c0_50 = arith.constant 0 : index
    %c0_51 = arith.constant 0 : index
    %131 = vector.load %arg12[%c0_49, %c0_50, %c0_51] : memref<1x1x64xf32, #tpu.memory_space<vmem>>, vector<1x1x64xf32>
    %132 = vector.shape_cast %131 : vector<1x1x64xf32> to vector<1x64xf32>
    %133 = vector.broadcast %132 : vector<1x64xf32> to vector<16x64xf32>
    %134 = arith.addf %130, %133 : vector<16x64xf32>
    %135 = arith.mulf %134, %134 : vector<16x64xf32>
    %136 = arith.mulf %134, %135 : vector<16x64xf32>
    %cst_52 = arith.constant 4.471500e-02 : f32
    %137 = vector.broadcast %cst_52 : f32 to vector<16x64xf32>
    %138 = arith.mulf %137, %136 : vector<16x64xf32>
    %139 = arith.addf %134, %138 : vector<16x64xf32>
    %cst_53 = arith.constant 0.797884583 : f32
    %140 = vector.broadcast %cst_53 : f32 to vector<16x64xf32>
    %141 = arith.mulf %140, %139 : vector<16x64xf32>
    %142 = math.tanh %141 : vector<16x64xf32>
    %cst_54 = arith.constant 1.000000e+00 : f32
    %143 = vector.broadcast %cst_54 : f32 to vector<16x64xf32>
    %144 = arith.addf %143, %142 : vector<16x64xf32>
    %cst_55 = arith.constant 5.000000e-01 : f32
    %145 = vector.broadcast %cst_55 : f32 to vector<16x64xf32>
    %146 = arith.mulf %145, %144 : vector<16x64xf32>
    %147 = arith.mulf %134, %146 : vector<16x64xf32>
    %c0_56 = arith.constant 0 : index
    %c0_57 = arith.constant 0 : index
    %c0_58 = arith.constant 0 : index
    %148 = vector.load %arg13[%c0_56, %c0_57, %c0_58] : memref<1x64x32xf32, #tpu.memory_space<vmem>>, vector<1x64x32xf32>
    %149 = vector.shape_cast %148 : vector<1x64x32xf32> to vector<64x32xf32>
    %cst_59 = arith.constant dense<0.000000e+00> : vector<16x32xf32>
    %150 = tpu.matmul %147, %149, %cst_59 {dimension_numbers = #tpu.dot_dimension_numbers<[1], [0], [0], [1], [0, 0, 1, 1], [], []>} : vector<16x64xf32>, vector<64x32xf32>, vector<16x32xf32> -> vector<16x32xf32>
    %c0_60 = arith.constant 0 : index
    %c0_61 = arith.constant 0 : index
    %c0_62 = arith.constant 0 : index
    %151 = vector.load %arg14[%c0_60, %c0_61, %c0_62] : memref<1x1x32xf32, #tpu.memory_space<vmem>>, vector<1x1x32xf32>
    %152 = vector.shape_cast %151 : vector<1x1x32xf32> to vector<1x32xf32>
    %153 = vector.broadcast %152 : vector<1x32xf32> to vector<16x32xf32>
    %154 = arith.addf %150, %153 : vector<16x32xf32>
    %155 = arith.addf %154, %127 : vector<16x32xf32>
    %c0_63 = arith.constant 0 : index
    %c0_64 = arith.constant 0 : index
    %c0_65 = arith.constant 0 : index
    %156 = vector.load %arg15[%c0_63, %c0_64, %c0_65] : memref<1x1x32xf32, #tpu.memory_space<vmem>>, vector<1x1x32xf32>
    %157 = vector.shape_cast %156 : vector<1x1x32xf32> to vector<1x32xf32>
    %c0_66 = arith.constant 0 : index
    %c0_67 = arith.constant 0 : index
    %c0_68 = arith.constant 0 : index
    %158 = vector.load %arg16[%c0_66, %c0_67, %c0_68] : memref<1x1x32xf32, #tpu.memory_space<vmem>>, vector<1x1x32xf32>
    %159 = vector.shape_cast %158 : vector<1x1x32xf32> to vector<1x32xf32>
    %cst_69 = arith.constant dense<0.000000e+00> : vector<16xf32>
    %160 = vector.multi_reduction <add>, %155, %cst_69 [1] : vector<16x32xf32> to vector<16xf32>
    %161 = vector.shape_cast %160 : vector<16xf32> to vector<16x1xf32>
    %cst_70 = arith.constant 3.200000e+01 : f32
    %162 = vector.broadcast %cst_70 : f32 to vector<16x1xf32>
    %163 = arith.divf %161, %162 : vector<16x1xf32>
    %164 = vector.broadcast %163 : vector<16x1xf32> to vector<16x32xf32>
    %165 = arith.subf %155, %164 : vector<16x32xf32>
    %166 = arith.mulf %165, %165 : vector<16x32xf32>
    %cst_71 = arith.constant dense<0.000000e+00> : vector<16xf32>
    %167 = vector.multi_reduction <add>, %166, %cst_71 [1] : vector<16x32xf32> to vector<16xf32>
    %168 = vector.shape_cast %167 : vector<16xf32> to vector<16x1xf32>
    %cst_72 = arith.constant 3.200000e+01 : f32
    %169 = vector.broadcast %cst_72 : f32 to vector<16x1xf32>
    %170 = arith.divf %168, %169 : vector<16x1xf32>
    %171 = vector.broadcast %163 : vector<16x1xf32> to vector<16x32xf32>
    %172 = arith.subf %155, %171 : vector<16x32xf32>
    %cst_73 = arith.constant 9.99999996E-13 : f32
    %173 = vector.broadcast %cst_73 : f32 to vector<16x1xf32>
    %174 = arith.addf %170, %173 : vector<16x1xf32>
    %175 = math.rsqrt %174 : vector<16x1xf32>
    %176 = vector.broadcast %175 : vector<16x1xf32> to vector<16x32xf32>
    %177 = arith.mulf %172, %176 : vector<16x32xf32>
    %178 = vector.broadcast %157 : vector<1x32xf32> to vector<16x32xf32>
    %179 = arith.mulf %177, %178 : vector<16x32xf32>
    %180 = vector.broadcast %159 : vector<1x32xf32> to vector<16x32xf32>
    %181 = arith.addf %179, %180 : vector<16x32xf32>
    %c0_74 = arith.constant 0 : index
    %c0_75 = arith.constant 0 : index
    %182 = vector.load %arg20[%c0_74, %c0_75] : memref<16x32xf32, #tpu.memory_space<vmem>>, vector<16x32xf32>
    tpu.vector_store %arg20[%c0_74, %c0_75], %181 {strides = array<i32>} : memref<16x32xf32, #tpu.memory_space<vmem>>, vector<16x32xf32>,
    %c1_i32 = arith.constant 1 : i32
    %183 = arith.cmpi eq, %arg0, %c1_i32 : i32
    %184 = arith.extui %183 : i1 to i32
    %c0_i32_76 = arith.constant 0 : i32
    %185 = arith.cmpi ne, %184, %c0_i32_76 : i32
    scf.if %185 {
      %186 = vector.shape_cast %181 : vector<16x32xf32> to vector<2x8x32xf32>
      %187 = vector.extract_strided_slice %186 {offsets = [0, 0, 0], sizes = [2, 1, 32], strides = [1, 1, 1]} : vector<2x8x32xf32> to vector<2x1x32xf32>
      %188 = vector.shape_cast %187 : vector<2x1x32xf32> to vector<2x32xf32>
      %c0_77 = arith.constant 0 : index
      %c0_78 = arith.constant 0 : index
      %189 = vector.load %arg17[%c0_77, %c0_78] : memref<32x128xf32, #tpu.memory_space<vmem>>, vector<32x128xf32>
      %cst_79 = arith.constant dense<0.000000e+00> : vector<2x128xf32>
      %190 = tpu.matmul %188, %189, %cst_79 {dimension_numbers = #tpu.dot_dimension_numbers<[1], [0], [0], [1], [0, 0, 1, 1], [], []>} : vector<2x32xf32>, vector<32x128xf32>, vector<2x128xf32> -> vector<2x128xf32>
      %c0_80 = arith.constant 0 : index
      %c0_81 = arith.constant 0 : index
      %191 = vector.load %arg18[%c0_80, %c0_81] : memref<1x128xf32, #tpu.memory_space<vmem>>, vector<1x128xf32>
      %192 = vector.broadcast %191 : vector<1x128xf32> to vector<2x128xf32>
      %193 = arith.addf %190, %192 : vector<2x128xf32>
      %c0_82 = arith.constant 0 : index
      %c0_83 = arith.constant 0 : index
      %194 = vector.load %arg19[%c0_82, %c0_83] : memref<2x128xf32, #tpu.memory_space<vmem>>, vector<2x128xf32>
      tpu.vector_store %arg19[%c0_82, %c0_83], %193 {strides = array<i32>} : memref<2x128xf32, #tpu.memory_space<vmem>>, vector<2x128xf32>,
    } else {
    }
    return
  }
  func.func @transform_0(%arg0: i32) -> (i32, i32) {
    %c0_i32 = arith.constant 0 : i32
    %c0_i32_0 = arith.constant 0 : i32
    %c0_i32_1 = arith.constant 0 : i32
    return %c0_i32, %c0_i32_0 : i32, i32
  }
  func.func @transform_1(%arg0: i32) -> (i32, i32, i32) {
    %c0_i32 = arith.constant 0 : i32
    %c0_i32_0 = arith.constant 0 : i32
    %c0_i32_1 = arith.constant 0 : i32
    %c0_i32_2 = arith.constant 0 : i32
    return %c0_i32, %c0_i32_0, %c0_i32_1 : i32, i32, i32
  }
  func.func @transform_2(%arg0: i32) -> (i32, i32) {
    %c0_i32 = arith.constant 0 : i32
    %c0_i32_0 = arith.constant 0 : i32
    %c0_i32_1 = arith.constant 0 : i32
    return %c0_i32, %c0_i32_0 : i32, i32
  }
  func.func @transform_3(%arg0: i32) -> (i32, i32) {
    %c0_i32 = arith.constant 0 : i32
    %c0_i32_0 = arith.constant 0 : i32
    %c0_i32_1 = arith.constant 0 : i32
    return %c0_i32, %c0_i32_0 : i32, i32
  }
  func.func @transform_4(%arg0: i32) -> (i32, i32, i32) {
    %c0_i32 = arith.constant 0 : i32
    %c0_i32_0 = arith.constant 0 : i32
    %c0_i32_1 = arith.constant 0 : i32
    return %arg0, %c0_i32, %c0_i32_0 : i32, i32, i32
  }
  func.func @transform_5(%arg0: i32) -> (i32, i32, i32) {
    %c0_i32 = arith.constant 0 : i32
    %c0_i32_0 = arith.constant 0 : i32
    %c0_i32_1 = arith.constant 0 : i32
    return %arg0, %c0_i32, %c0_i32_0 : i32, i32, i32
  }
  func.func @transform_6(%arg0: i32) -> (i32, i32, i32) {
    %c0_i32 = arith.constant 0 : i32
    %c0_i32_0 = arith.constant 0 : i32
    %c0_i32_1 = arith.constant 0 : i32
    return %arg0, %c0_i32, %c0_i32_0 : i32, i32, i32
  }
  func.func @transform_7(%arg0: i32) -> (i32, i32, i32) {
    %c0_i32 = arith.constant 0 : i32
    %c0_i32_0 = arith.constant 0 : i32
    %c0_i32_1 = arith.constant 0 : i32
    return %arg0, %c0_i32, %c0_i32_0 : i32, i32, i32
  }
  func.func @transform_8(%arg0: i32) -> (i32, i32, i32) {
    %c0_i32 = arith.constant 0 : i32
    %c0_i32_0 = arith.constant 0 : i32
    %c0_i32_1 = arith.constant 0 : i32
    return %arg0, %c0_i32, %c0_i32_0 : i32, i32, i32
  }
  func.func @transform_9(%arg0: i32) -> (i32, i32, i32) {
    %c0_i32 = arith.constant 0 : i32
    %c0_i32_0 = arith.constant 0 : i32
    %c0_i32_1 = arith.constant 0 : i32
    return %arg0, %c0_i32, %c0_i32_0 : i32, i32, i32
  }
  func.func @transform_10(%arg0: i32) -> (i32, i32, i32) {
    %c0_i32 = arith.constant 0 : i32
    %c0_i32_0 = arith.constant 0 : i32
    %c0_i32_1 = arith.constant 0 : i32
    return %arg0, %c0_i32, %c0_i32_0 : i32, i32, i32
  }
  func.func @transform_11(%arg0: i32) -> (i32, i32, i32) {
    %c0_i32 = arith.constant 0 : i32
    %c0_i32_0 = arith.constant 0 : i32
    %c0_i32_1 = arith.constant 0 : i32
    return %arg0, %c0_i32, %c0_i32_0 : i32, i32, i32
  }
  func.func @transform_12(%arg0: i32) -> (i32, i32, i32) {
    %c0_i32 = arith.constant 0 : i32
    %c0_i32_0 = arith.constant 0 : i32
    %c0_i32_1 = arith.constant 0 : i32
    return %arg0, %c0_i32, %c0_i32_0 : i32, i32, i32
  }
  func.func @transform_13(%arg0: i32) -> (i32, i32, i32) {
    %c0_i32 = arith.constant 0 : i32
    %c0_i32_0 = arith.constant 0 : i32
    %c0_i32_1 = arith.constant 0 : i32
    return %arg0, %c0_i32, %c0_i32_0 : i32, i32, i32
  }
  func.func @transform_14(%arg0: i32) -> (i32, i32, i32) {
    %c0_i32 = arith.constant 0 : i32
    %c0_i32_0 = arith.constant 0 : i32
    %c0_i32_1 = arith.constant 0 : i32
    return %arg0, %c0_i32, %c0_i32_0 : i32, i32, i32
  }
  func.func @transform_15(%arg0: i32) -> (i32, i32, i32) {
    %c0_i32 = arith.constant 0 : i32
    %c0_i32_0 = arith.constant 0 : i32
    %c0_i32_1 = arith.constant 0 : i32
    return %arg0, %c0_i32, %c0_i32_0 : i32, i32, i32
  }
  func.func @transform_16(%arg0: i32) -> (i32, i32) {
    %c0_i32 = arith.constant 0 : i32
    %c0_i32_0 = arith.constant 0 : i32
    %c0_i32_1 = arith.constant 0 : i32
    return %c0_i32, %c0_i32_0 : i32, i32
  }
  func.func @transform_17(%arg0: i32) -> (i32, i32) {
    %c0_i32 = arith.constant 0 : i32
    %c0_i32_0 = arith.constant 0 : i32
    %c0_i32_1 = arith.constant 0 : i32
    return %c0_i32, %c0_i32_0 : i32, i32
  }
  func.func @transform_18(%arg0: i32) -> (i32, i32) {
    %c0_i32 = arith.constant 0 : i32
    %c0_i32_0 = arith.constant 0 : i32
    %c0_i32_1 = arith.constant 0 : i32
    return %c0_i32, %c0_i32_0 : i32, i32
  }
}

</mosaic_0001>

<llo_original>
// kernel: smiles_classifier_forward.1
$region0: #{smiles_classifier_forward.1}
  #allocation0 [shape = 'u32[]', space=smem, size = 0x4, offset = 0x4, fixed_abs, tag = 'smem constant byte address 0x4 - core index']
  #allocation1 [shape = 'u32[72,128]{1,0:T(1,128)}', space=vmem, size = 0x9000, scoped, tag = 'internal scratch']
  #allocation2 [shape = 'f32[16,32]{1,0:T(8,128)}', space=vmem, size = 0x2000, scoped, tag = 'scratch operand']
  %s0 = inlined_call_operand.vmem [shape: f32[16,32], index: 0, kind: input, shape index: {}]
  %s1 = inlined_call_operand.vmem [shape: f32[2,1,8], index: 1, kind: input, shape index: {}]
  %s2 = inlined_call_operand.vmem [shape: f32[1,32], index: 2, kind: input, shape index: {}]
  %s3 = inlined_call_operand.vmem [shape: f32[1,32], index: 3, kind: input, shape index: {}]
  %s4 = inlined_call_operand.vmem [shape: f32[2,32,96], index: 4, kind: input, shape index: {}]
  %s5 = inlined_call_operand.vmem [shape: f32[2,1,96], index: 5, kind: input, shape index: {}]
  %s6 = inlined_call_operand.vmem [shape: f32[2,32,32], index: 6, kind: input, shape index: {}]
  %s7 = inlined_call_operand.vmem [shape: f32[2,1,32], index: 7, kind: input, shape index: {}]
  %s8 = inlined_call_operand.vmem [shape: f32[2,1,32], index: 8, kind: input, shape index: {}]
  %s9 = inlined_call_operand.vmem [shape: f32[2,1,32], index: 9, kind: input, shape index: {}]
  %s10 = inlined_call_operand.vmem [shape: f32[2,32,64], index: 10, kind: input, shape index: {}]
  %s11 = inlined_call_operand.vmem [shape: f32[2,1,64], index: 11, kind: input, shape index: {}]
  %s12 = inlined_call_operand.vmem [shape: f32[2,64,32], index: 12, kind: input, shape index: {}]
  %s13 = inlined_call_operand.vmem [shape: f32[2,1,32], index: 13, kind: input, shape index: {}]
  %s14 = inlined_call_operand.vmem [shape: f32[2,1,32], index: 14, kind: input, shape index: {}]
  %s15 = inlined_call_operand.vmem [shape: f32[2,1,32], index: 15, kind: input, shape index: {}]
  %s16 = inlined_call_operand.vmem [shape: f32[32,128], index: 16, kind: input, shape index: {}]
  %s17 = inlined_call_operand.vmem [shape: f32[1,128], index: 17, kind: input, shape index: {}]
  %s18 = inlined_call_operand.hbm [shape: f32[2,128], index: 18, kind: output, shape index: {}]
  %s19 = sld [smem:[#allocation0]]
  $region113: #{smiles_classifier_forward.1} parent=0
    _
  %s21 = ssub.s32 1, %s19
  %s22 = scalar_select 0, %s21, %s19
  $region1: #{smiles_classifier_forward.1} parent=0
    #allocation3 [shape = 'u8[1024]{0}', space=vmem, size = 0x400, scoped, tag = 'output window, operand 0, single buffered']
    #allocation4 [shape = 's32[2]{0}', space=sflag, size = 0x8, scoped, tag = 'scoped memory for smiles_classifier_forward.1']
    %23 = vsyncpa [#allocation4], 0
    loop: start=0, step=1, limit=4
    $region2: #{smiles_classifier_forward.1} parent=1 // loop_pre_header
      _
    $region3: #{smiles_classifier_forward.1} parent=1 // loop_header
      %s25 = sphi 0, %s29
      %p26 = scmp.ge.s32.totalorder %s25, 4
      %s33 = sphi 0, %s33
      %s35 = sphi 0, %s33
      %s36 = sphi 0, %s35
      %s50 = sphi 0, %s36
      %s54 = sphi 0, %s54
      %s56 = sphi 0, %s54
      %s57 = sphi 0, %s56
      %s71 = sphi 0, %s57
      %s75 = sphi 0, %s75
      %s77 = sphi 0, %s75
      %s78 = sphi 0, %s77
      %s92 = sphi 0, %s78
      %s96 = sphi 0, %s96
      %s98 = sphi 0, %s96
      %s99 = sphi 0, %s98
      %s113 = sphi 0, %s99
      %s119 = sphi 0, %s121
      %s122 = sphi 0, %s119
      %s123 = sphi 0, %s122
      %s139 = sphi 0, %s123
      %s145 = sphi 0, %s147
      %s148 = sphi 0, %s145
      %s149 = sphi 0, %s148
      %s165 = sphi 0, %s149
      %s171 = sphi 0, %s173
      %s174 = sphi 0, %s171
      %s175 = sphi 0, %s174
      %s191 = sphi 0, %s175
      %s197 = sphi 0, %s199
      %s200 = sphi 0, %s197
      %s201 = sphi 0, %s200
      %s217 = sphi 0, %s201
      %s223 = sphi 0, %s225
      %s226 = sphi 0, %s223
      %s227 = sphi 0, %s226
      %s243 = sphi 0, %s227
      %s249 = sphi 0, %s251
      %s252 = sphi 0, %s249
      %s253 = sphi 0, %s252
      %s269 = sphi 0, %s253
      %s275 = sphi 0, %s277
      %s278 = sphi 0, %s275
      %s279 = sphi 0, %s278
      %s295 = sphi 0, %s279
      %s301 = sphi 0, %s303
      %s304 = sphi 0, %s301
      %s305 = sphi 0, %s304
      %s321 = sphi 0, %s305
      %s327 = sphi 0, %s329
      %s330 = sphi 0, %s327
      %s331 = sphi 0, %s330
      %s347 = sphi 0, %s331
      %s353 = sphi 0, %s355
      %s356 = sphi 0, %s353
      %s357 = sphi 0, %s356
      %s373 = sphi 0, %s357
      %s379 = sphi 0, %s381
      %s382 = sphi 0, %s379
      %s383 = sphi 0, %s382
      %s399 = sphi 0, %s383
      %s405 = sphi 0, %s407
      %s408 = sphi 0, %s405
      %s409 = sphi 0, %s408
      %s425 = sphi 0, %s409
      %s429 = sphi 0, %s429
      %s431 = sphi 0, %s429
      %s432 = sphi 0, %s431
      %s446 = sphi 0, %s432
      %s450 = sphi 0, %s450
      %s452 = sphi 0, %s450
      %s453 = sphi 0, %s452
      %s467 = sphi 0, %s453
      %s471 = sphi 0, %s471
      %s473 = sphi 0, %s471
      %s474 = sphi 0, %s473
      %s488 = sphi 0, %s474
    $region4: #{smiles_classifier_forward.1} parent=1 // loop_header_branch
      %28 = sbr.rel (%p26) target = $region8
    $region5: #{smiles_classifier_forward.1} parent=1 // loop_body
      %s30 = ssub.s32 %s25, 1
      %s31 = ssub.s32 %s25, 2
      %s32 = sadd.s32 %s25, 1
      %s34 = sadd.s32 %s33, 1
      %p37 = scmp.eq.s32.totalorder %s25, 1
      %p38 = scmp.ne.s32.totalorder %s33, %s35
      %p39 = scmp.eq.s32.totalorder %s25, 0
      %p40 = por %p38, %p39
      %p41 = scmp.ne.s32.totalorder %s33, %s35
      %p42 = scmp.eq.s32.totalorder %s30, 1
      %p43 = por %p41, %p42
      %p44 = scmp.ne.s32.totalorder %s35, %s36
      %p45 = scmp.eq.s32.totalorder %s30, 0
      %p46 = por %p44, %p45
      %p47 = scmp.ne.s32.totalorder %s35, %s36
      %p48 = scmp.eq.s32.totalorder %s31, 1
      %p49 = por %p47, %p48
      %p51 = scmp.ne.s32.totalorder %s36, %s50
      %p52 = scmp.eq.s32.totalorder %s31, 0
      %p53 = por %p51, %p52
      %s55 = sadd.s32 %s54, 1
      %p58 = scmp.eq.s32.totalorder %s25, 1
      %p59 = scmp.ne.s32.totalorder %s54, %s56
      %p60 = scmp.eq.s32.totalorder %s25, 0
      %p61 = por %p59, %p60
      %p62 = scmp.ne.s32.totalorder %s54, %s56
      %p63 = scmp.eq.s32.totalorder %s30, 1
      %p64 = por %p62, %p63
      %p65 = scmp.ne.s32.totalorder %s56, %s57
      %p66 = scmp.eq.s32.totalorder %s30, 0
      %p67 = por %p65, %p66
      %p68 = scmp.ne.s32.totalorder %s56, %s57
      %p69 = scmp.eq.s32.totalorder %s31, 1
      %p70 = por %p68, %p69
      %p72 = scmp.ne.s32.totalorder %s57, %s71
      %p73 = scmp.eq.s32.totalorder %s31, 0
      %p74 = por %p72, %p73
      %s76 = sadd.s32 %s75, 1
      %p79 = scmp.eq.s32.totalorder %s25, 1
      %p80 = scmp.ne.s32.totalorder %s75, %s77
      %p81 = scmp.eq.s32.totalorder %s25, 0
      %p82 = por %p80, %p81
      %p83 = scmp.ne.s32.totalorder %s75, %s77
      %p84 = scmp.eq.s32.totalorder %s30, 1
      %p85 = por %p83, %p84
      %p86 = scmp.ne.s32.totalorder %s77, %s78
      %p87 = scmp.eq.s32.totalorder %s30, 0
      %p88 = por %p86, %p87
      %p89 = scmp.ne.s32.totalorder %s77, %s78
      %p90 = scmp.eq.s32.totalorder %s31, 1
      %p91 = por %p89, %p90
      %p93 = scmp.ne.s32.totalorder %s78, %s92
      %p94 = scmp.eq.s32.totalorder %s31, 0
      %p95 = por %p93, %p94
      %s97 = sadd.s32 %s96, 1
      %p100 = scmp.eq.s32.totalorder %s25, 1
      %p101 = scmp.ne.s32.totalorder %s96, %s98
      %p102 = scmp.eq.s32.totalorder %s25, 0
      %p103 = por %p101, %p102
      %p104 = scmp.ne.s32.totalorder %s96, %s98
      %p105 = scmp.eq.s32.totalorder %s30, 1
      %p106 = por %p104, %p105
      %p107 = scmp.ne.s32.totalorder %s98, %s99
      %p108 = scmp.eq.s32.totalorder %s30, 0
      %p109 = por %p107, %p108
      %p110 = scmp.ne.s32.totalorder %s98, %s99
      %p111 = scmp.eq.s32.totalorder %s31, 1
      %p112 = por %p110, %p111
      %p114 = scmp.ne.s32.totalorder %s99, %s113
      %p115 = scmp.eq.s32.totalorder %s31, 0
      %p116 = por %p114, %p115
      %s117 = ssub.s32 %s25, %s32
      %p118 = scmp.eq.s32.totalorder %s117, 0
      %s120 = sadd.s32 %s119, 1
      %s121 = scalar_select %p118, %s119, %s120
      %p124 = pneg %p118
      %p125 = scmp.eq.s32.totalorder %s25, 1
      %p126 = por %p124, %p125
      %p127 = scmp.ne.s32.totalorder %s119, %s122
      %p128 = scmp.eq.s32.totalorder %s25, 0
      %p129 = por %p127, %p128
      %p130 = scmp.ne.s32.totalorder %s119, %s122
      %p131 = scmp.eq.s32.totalorder %s30, 1
      %p132 = por %p130, %p131
      %p133 = scmp.ne.s32.totalorder %s122, %s123
      %p134 = scmp.eq.s32.totalorder %s30, 0
      %p135 = por %p133, %p134
      %p136 = scmp.ne.s32.totalorder %s122, %s123
      %p137 = scmp.eq.s32.totalorder %s31, 1
      %p138 = por %p136, %p137
      %p140 = scmp.ne.s32.totalorder %s123, %s139
      %p141 = scmp.eq.s32.totalorder %s31, 0
      %p142 = por %p140, %p141
      %s143 = ssub.s32 %s25, %s32
      %p144 = scmp.eq.s32.totalorder %s143, 0
      %s146 = sadd.s32 %s145, 1
      %s147 = scalar_select %p144, %s145, %s146
      %p150 = pneg %p144
      %p151 = scmp.eq.s32.totalorder %s25, 1
      %p152 = por %p150, %p151
      %p153 = scmp.ne.s32.totalorder %s145, %s148
      %p154 = scmp.eq.s32.totalorder %s25, 0
      %p155 = por %p153, %p154
      %p156 = scmp.ne.s32.totalorder %s145, %s148
      %p157 = scmp.eq.s32.totalorder %s30, 1
      %p158 = por %p156, %p157
      %p159 = scmp.ne.s32.totalorder %s148, %s149
      %p160 = scmp.eq.s32.totalorder %s30, 0
      %p161 = por %p159, %p160
      %p162 = scmp.ne.s32.totalorder %s148, %s149
      %p163 = scmp.eq.s32.totalorder %s31, 1
      %p164 = por %p162, %p163
      %p166 = scmp.ne.s32.totalorder %s149, %s165
      %p167 = scmp.eq.s32.totalorder %s31, 0
      %p168 = por %p166, %p167
      %s169 = ssub.s32 %s25, %s32
      %p170 = scmp.eq.s32.totalorder %s169, 0
      %s172 = sadd.s32 %s171, 1
      %s173 = scalar_select %p170, %s171, %s172
      %p176 = pneg %p170
      %p177 = scmp.eq.s32.totalorder %s25, 1
      %p178 = por %p176, %p177
      %p179 = scmp.ne.s32.totalorder %s171, %s174
      %p180 = scmp.eq.s32.totalorder %s25, 0
      %p181 = por %p179, %p180
      %p182 = scmp.ne.s32.totalorder %s171, %s174
      %p183 = scmp.eq.s32.totalorder %s30, 1
      %p184 = por %p182, %p183
      %p185 = scmp.ne.s32.totalorder %s174, %s175
      %p186 = scmp.eq.s32.totalorder %s30, 0
      %p187 = por %p185, %p186
      %p188 = scmp.ne.s32.totalorder %s174, %s175
      %p189 = scmp.eq.s32.totalorder %s31, 1
      %p190 = por %p188, %p189
      %p192 = scmp.ne.s32.totalorder %s175, %s191
      %p193 = scmp.eq.s32.totalorder %s31, 0
      %p194 = por %p192, %p193
      %s195 = ssub.s32 %s25, %s32
      %p196 = scmp.eq.s32.totalorder %s195, 0
      %s198 = sadd.s32 %s197, 1
      %s199 = scalar_select %p196, %s197, %s198
      %p202 = pneg %p196
      %p203 = scmp.eq.s32.totalorder %s25, 1
      %p204 = por %p202, %p203
      %p205 = scmp.ne.s32.totalorder %s197, %s200
      %p206 = scmp.eq.s32.totalorder %s25, 0
      %p207 = por %p205, %p206
      %p208 = scmp.ne.s32.totalorder %s197, %s200
      %p209 = scmp.eq.s32.totalorder %s30, 1
      %p210 = por %p208, %p209
      %p211 = scmp.ne.s32.totalorder %s200, %s201
      %p212 = scmp.eq.s32.totalorder %s30, 0
      %p213 = por %p211, %p212
      %p214 = scmp.ne.s32.totalorder %s200, %s201
      %p215 = scmp.eq.s32.totalorder %s31, 1
      %p216 = por %p214, %p215
      %p218 = scmp.ne.s32.totalorder %s201, %s217
      %p219 = scmp.eq.s32.totalorder %s31, 0
      %p220 = por %p218, %p219
      %s221 = ssub.s32 %s25, %s32
      %p222 = scmp.eq.s32.totalorder %s221, 0
      %s224 = sadd.s32 %s223, 1
      %s225 = scalar_select %p222, %s223, %s224
      %p228 = pneg %p222
      %p229 = scmp.eq.s32.totalorder %s25, 1
      %p230 = por %p228, %p229
      %p231 = scmp.ne.s32.totalorder %s223, %s226
      %p232 = scmp.eq.s32.totalorder %s25, 0
      %p233 = por %p231, %p232
      %p234 = scmp.ne.s32.totalorder %s223, %s226
      %p235 = scmp.eq.s32.totalorder %s30, 1
      %p236 = por %p234, %p235
      %p237 = scmp.ne.s32.totalorder %s226, %s227
      %p238 = scmp.eq.s32.totalorder %s30, 0
      %p239 = por %p237, %p238
      %p240 = scmp.ne.s32.totalorder %s226, %s227
      %p241 = scmp.eq.s32.totalorder %s31, 1
      %p242 = por %p240, %p241
      %p244 = scmp.ne.s32.totalorder %s227, %s243
      %p245 = scmp.eq.s32.totalorder %s31, 0
      %p246 = por %p244, %p245
      %s247 = ssub.s32 %s25, %s32
      %p248 = scmp.eq.s32.totalorder %s247, 0
      %s250 = sadd.s32 %s249, 1
      %s251 = scalar_select %p248, %s249, %s250
      %p254 = pneg %p248
      %p255 = scmp.eq.s32.totalorder %s25, 1
      %p256 = por %p254, %p255
      %p257 = scmp.ne.s32.totalorder %s249, %s252
      %p258 = scmp.eq.s32.totalorder %s25, 0
      %p259 = por %p257, %p258
      %p260 = scmp.ne.s32.totalorder %s249, %s252
      %p261 = scmp.eq.s32.totalorder %s30, 1
      %p262 = por %p260, %p261
      %p263 = scmp.ne.s32.totalorder %s252, %s253
      %p264 = scmp.eq.s32.totalorder %s30, 0
      %p265 = por %p263, %p264
      %p266 = scmp.ne.s32.totalorder %s252, %s253
      %p267 = scmp.eq.s32.totalorder %s31, 1
      %p268 = por %p266, %p267
      %p270 = scmp.ne.s32.totalorder %s253, %s269
      %p271 = scmp.eq.s32.totalorder %s31, 0
      %p272 = por %p270, %p271
      %s273 = ssub.s32 %s25, %s32
      %p274 = scmp.eq.s32.totalorder %s273, 0
      %s276 = sadd.s32 %s275, 1
      %s277 = scalar_select %p274, %s275, %s276
      %p280 = pneg %p274
      %p281 = scmp.eq.s32.totalorder %s25, 1
      %p282 = por %p280, %p281
      %p283 = scmp.ne.s32.totalorder %s275, %s278
      %p284 = scmp.eq.s32.totalorder %s25, 0
      %p285 = por %p283, %p284
      %p286 = scmp.ne.s32.totalorder %s275, %s278
      %p287 = scmp.eq.s32.totalorder %s30, 1
      %p288 = por %p286, %p287
      %p289 = scmp.ne.s32.totalorder %s278, %s279
      %p290 = scmp.eq.s32.totalorder %s30, 0
      %p291 = por %p289, %p290
      %p292 = scmp.ne.s32.totalorder %s278, %s279
      %p293 = scmp.eq.s32.totalorder %s31, 1
      %p294 = por %p292, %p293
      %p296 = scmp.ne.s32.totalorder %s279, %s295
      %p297 = scmp.eq.s32.totalorder %s31, 0
      %p298 = por %p296, %p297
      %s299 = ssub.s32 %s25, %s32
      %p300 = scmp.eq.s32.totalorder %s299, 0
      %s302 = sadd.s32 %s301, 1
      %s303 = scalar_select %p300, %s301, %s302
      %p306 = pneg %p300
      %p307 = scmp.eq.s32.totalorder %s25, 1
      %p308 = por %p306, %p307
      %p309 = scmp.ne.s32.totalorder %s301, %s304
      %p310 = scmp.eq.s32.totalorder %s25, 0
      %p311 = por %p309, %p310
      %p312 = scmp.ne.s32.totalorder %s301, %s304
      %p313 = scmp.eq.s32.totalorder %s30, 1
      %p314 = por %p312, %p313
      %p315 = scmp.ne.s32.totalorder %s304, %s305
      %p316 = scmp.eq.s32.totalorder %s30, 0
      %p317 = por %p315, %p316
      %p318 = scmp.ne.s32.totalorder %s304, %s305
      %p319 = scmp.eq.s32.totalorder %s31, 1
      %p320 = por %p318, %p319
      %p322 = scmp.ne.s32.totalorder %s305, %s321
      %p323 = scmp.eq.s32.totalorder %s31, 0
      %p324 = por %p322, %p323
      %s325 = ssub.s32 %s25, %s32
      %p326 = scmp.eq.s32.totalorder %s325, 0
      %s328 = sadd.s32 %s327, 1
      %s329 = scalar_select %p326, %s327, %s328
      %p332 = pneg %p326
      %p333 = scmp.eq.s32.totalorder %s25, 1
      %p334 = por %p332, %p333
      %p335 = scmp.ne.s32.totalorder %s327, %s330
      %p336 = scmp.eq.s32.totalorder %s25, 0
      %p337 = por %p335, %p336
      %p338 = scmp.ne.s32.totalorder %s327, %s330
      %p339 = scmp.eq.s32.totalorder %s30, 1
      %p340 = por %p338, %p339
      %p341 = scmp.ne.s32.totalorder %s330, %s331
      %p342 = scmp.eq.s32.totalorder %s30, 0
      %p343 = por %p341, %p342
      %p344 = scmp.ne.s32.totalorder %s330, %s331
      %p345 = scmp.eq.s32.totalorder %s31, 1
      %p346 = por %p344, %p345
      %p348 = scmp.ne.s32.totalorder %s331, %s347
      %p349 = scmp.eq.s32.totalorder %s31, 0
      %p350 = por %p348, %p349
      %s351 = ssub.s32 %s25, %s32
      %p352 = scmp.eq.s32.totalorder %s351, 0
      %s354 = sadd.s32 %s353, 1
      %s355 = scalar_select %p352, %s353, %s354
      %p358 = pneg %p352
      %p359 = scmp.eq.s32.totalorder %s25, 1
      %p360 = por %p358, %p359
      %p361 = scmp.ne.s32.totalorder %s353, %s356
      %p362 = scmp.eq.s32.totalorder %s25, 0
      %p363 = por %p361, %p362
      %p364 = scmp.ne.s32.totalorder %s353, %s356
      %p365 = scmp.eq.s32.totalorder %s30, 1
      %p366 = por %p364, %p365
      %p367 = scmp.ne.s32.totalorder %s356, %s357
      %p368 = scmp.eq.s32.totalorder %s30, 0
      %p369 = por %p367, %p368
      %p370 = scmp.ne.s32.totalorder %s356, %s357
      %p371 = scmp.eq.s32.totalorder %s31, 1
      %p372 = por %p370, %p371
      %p374 = scmp.ne.s32.totalorder %s357, %s373
      %p375 = scmp.eq.s32.totalorder %s31, 0
      %p376 = por %p374, %p375
      %s377 = ssub.s32 %s25, %s32
      %p378 = scmp.eq.s32.totalorder %s377, 0
      %s380 = sadd.s32 %s379, 1
      %s381 = scalar_select %p378, %s379, %s380
      %p384 = pneg %p378
      %p385 = scmp.eq.s32.totalorder %s25, 1
      %p386 = por %p384, %p385
      %p387 = scmp.ne.s32.totalorder %s379, %s382
      %p388 = scmp.eq.s32.totalorder %s25, 0
      %p389 = por %p387, %p388
      %p390 = scmp.ne.s32.totalorder %s379, %s382
      %p391 = scmp.eq.s32.totalorder %s30, 1
      %p392 = por %p390, %p391
      %p393 = scmp.ne.s32.totalorder %s382, %s383
      %p394 = scmp.eq.s32.totalorder %s30, 0
      %p395 = por %p393, %p394
      %p396 = scmp.ne.s32.totalorder %s382, %s383
      %p397 = scmp.eq.s32.totalorder %s31, 1
      %p398 = por %p396, %p397
      %p400 = scmp.ne.s32.totalorder %s383, %s399
      %p401 = scmp.eq.s32.totalorder %s31, 0
      %p402 = por %p400, %p401
      %s403 = ssub.s32 %s25, %s32
      %p404 = scmp.eq.s32.totalorder %s403, 0
      %s406 = sadd.s32 %s405, 1
      %s407 = scalar_select %p404, %s405, %s406
      %p410 = pneg %p404
      %p411 = scmp.eq.s32.totalorder %s25, 1
      %p412 = por %p410, %p411
      %p413 = scmp.ne.s32.totalorder %s405, %s408
      %p414 = scmp.eq.s32.totalorder %s25, 0
      %p415 = por %p413, %p414
      %p416 = scmp.ne.s32.totalorder %s405, %s408
      %p417 = scmp.eq.s32.totalorder %s30, 1
      %p418 = por %p416, %p417
      %p419 = scmp.ne.s32.totalorder %s408, %s409
      %p420 = scmp.eq.s32.totalorder %s30, 0
      %p421 = por %p419, %p420
      %p422 = scmp.ne.s32.totalorder %s408, %s409
      %p423 = scmp.eq.s32.totalorder %s31, 1
      %p424 = por %p422, %p423
      %p426 = scmp.ne.s32.totalorder %s409, %s425
      %p427 = scmp.eq.s32.totalorder %s31, 0
      %p428 = por %p426, %p427
      %s430 = sadd.s32 %s429, 1
      %p433 = scmp.eq.s32.totalorder %s25, 1
      %p434 = scmp.ne.s32.totalorder %s429, %s431
      %p435 = scmp.eq.s32.totalorder %s25, 0
      %p436 = por %p434, %p435
      %p437 = scmp.ne.s32.totalorder %s429, %s431
      %p438 = scmp.eq.s32.totalorder %s30, 1
      %p439 = por %p437, %p438
      %p440 = scmp.ne.s32.totalorder %s431, %s432
      %p441 = scmp.eq.s32.totalorder %s30, 0
      %p442 = por %p440, %p441
      %p443 = scmp.ne.s32.totalorder %s431, %s432
      %p444 = scmp.eq.s32.totalorder %s31, 1
      %p445 = por %p443, %p444
      %p447 = scmp.ne.s32.totalorder %s432, %s446
      %p448 = scmp.eq.s32.totalorder %s31, 0
      %p449 = por %p447, %p448
      %s451 = sadd.s32 %s450, 1
      %p454 = scmp.eq.s32.totalorder %s25, 1
      %p455 = scmp.ne.s32.totalorder %s450, %s452
      %p456 = scmp.eq.s32.totalorder %s25, 0
      %p457 = por %p455, %p456
      %p458 = scmp.ne.s32.totalorder %s450, %s452
      %p459 = scmp.eq.s32.totalorder %s30, 1
      %p460 = por %p458, %p459
      %p461 = scmp.ne.s32.totalorder %s452, %s453
      %p462 = scmp.eq.s32.totalorder %s30, 0
      %p463 = por %p461, %p462
      %p464 = scmp.ne.s32.totalorder %s452, %s453
      %p465 = scmp.eq.s32.totalorder %s31, 1
      %p466 = por %p464, %p465
      %p468 = scmp.ne.s32.totalorder %s453, %s467
      %p469 = scmp.eq.s32.totalorder %s31, 0
      %p470 = por %p468, %p469
      %s472 = sadd.s32 %s471, 1
      %p475 = scmp.eq.s32.totalorder %s25, 1
      %p476 = scmp.ne.s32.totalorder %s471, %s473
      %p477 = scmp.eq.s32.totalorder %s25, 0
      %p478 = por %p476, %p477
      %p479 = scmp.ne.s32.totalorder %s471, %s473
      %p480 = scmp.eq.s32.totalorder %s30, 1
      %p481 = por %p479, %p480
      %p482 = scmp.ne.s32.totalorder %s473, %s474
      %p483 = scmp.eq.s32.totalorder %s30, 0
      %p484 = por %p482, %p483
      %p485 = scmp.ne.s32.totalorder %s473, %s474
      %p486 = scmp.eq.s32.totalorder %s31, 1
      %p487 = por %p485, %p486
      %p489 = scmp.ne.s32.totalorder %s474, %s488
      %p490 = scmp.eq.s32.totalorder %s31, 0
      %p491 = por %p489, %p490
      %p492 = scmp.le.s32.totalorder 1, %s25
      %p493 = scmp.lt.s32.totalorder %s25, 3
      %p494 = pnand %p492, %p493
      %p495 = pneg %p494
      // Predicated region
      $region9: #{smiles_classifier_forward.1} parent=5 // pred_check
        _
      $region10: #{smiles_classifier_forward.1} parent=5 // pred_check_branch
        %497 = sbr.rel (%p494) target = $region12
      $region11: #{smiles_classifier_forward.1} parent=5 // pred_region
        %s498 = ssub.s32 %s25, 1
        // Predicated region
        $region13: #{smiles_classifier_forward.1} parent=11 // pred_check
          %p499 = pneg %p46
        $region14: #{smiles_classifier_forward.1} parent=11 // pred_check_branch
          %501 = sbr.rel (%p499) target = $region16
        $region15: #{smiles_classifier_forward.1} parent=11 // pred_region
          _
        $region16: #{smiles_classifier_forward.1} parent=11 // pred_fallthru
          _
        // Predicated region
        $region17: #{smiles_classifier_forward.1} parent=11 // pred_check
          %p502 = pneg %p67
        $region18: #{smiles_classifier_forward.1} parent=11 // pred_check_branch
          %504 = sbr.rel (%p502) target = $region20
        $region19: #{smiles_classifier_forward.1} parent=11 // pred_region
          _
        $region20: #{smiles_classifier_forward.1} parent=11 // pred_fallthru
          _
        // Predicated region
        $region21: #{smiles_classifier_forward.1} parent=11 // pred_check
          %p505 = pneg %p88
        $region22: #{smiles_classifier_forward.1} parent=11 // pred_check_branch
          %507 = sbr.rel (%p505) target = $region24
        $region23: #{smiles_classifier_forward.1} parent=11 // pred_region
          _
        $region24: #{smiles_classifier_forward.1} parent=11 // pred_fallthru
          _
        // Predicated region
        $region25: #{smiles_classifier_forward.1} parent=11 // pred_check
          %p508 = pneg %p109
        $region26: #{smiles_classifier_forward.1} parent=11 // pred_check_branch
          %510 = sbr.rel (%p508) target = $region28
        $region27: #{smiles_classifier_forward.1} parent=11 // pred_region
          _
        $region28: #{smiles_classifier_forward.1} parent=11 // pred_fallthru
          _
        // Predicated region
        $region29: #{smiles_classifier_forward.1} parent=11 // pred_check
          %p511 = pneg %p442
        $region30: #{smiles_classifier_forward.1} parent=11 // pred_check_branch
          %513 = sbr.rel (%p511) target = $region32
        $region31: #{smiles_classifier_forward.1} parent=11 // pred_region
          _
        $region32: #{smiles_classifier_forward.1} parent=11 // pred_fallthru
          _
        // Predicated region
        $region33: #{smiles_classifier_forward.1} parent=11 // pred_check
          %p514 = pneg %p463
        $region34: #{smiles_classifier_forward.1} parent=11 // pred_check_branch
          %516 = sbr.rel (%p514) target = $region36
        $region35: #{smiles_classifier_forward.1} parent=11 // pred_region
          _
        $region36: #{smiles_classifier_forward.1} parent=11 // pred_fallthru
          _
      $region12: #{smiles_classifier_forward.1} parent=5 // pred_fallthru
        _
      %p517 = scmp.lt.s32.totalorder %s25, 2
      // Predicated region
      $region37: #{smiles_classifier_forward.1} parent=5 // pred_check
        %p518 = pneg %p517
      $region38: #{smiles_classifier_forward.1} parent=5 // pred_check_branch
        %520 = sbr.rel (%p518) target = $region40
      $region39: #{smiles_classifier_forward.1} parent=5 // pred_region
        // Predicated region
        $region41: #{smiles_classifier_forward.1} parent=39 // pred_check
          %p521 = pneg %p129
        $region42: #{smiles_classifier_forward.1} parent=39 // pred_check_branch
          %523 = sbr.rel (%p521) target = $region44
        $region43: #{smiles_classifier_forward.1} parent=39 // pred_region
          %p524 = scmp.lt.s32.totalorder %s25, 1
          %s525 = scalar_select %p524, %s25, 1
          %s526 = smul.addr %s525, 4
          %s527 = smul.addr %s526, 8
          %s528 = scalar_lea.vmem %s4, %s527
        $region44: #{smiles_classifier_forward.1} parent=39 // pred_fallthru
          _
        // Predicated region
        $region45: #{smiles_classifier_forward.1} parent=39 // pred_check
          %p529 = pneg %p155
        $region46: #{smiles_classifier_forward.1} parent=39 // pred_check_branch
          %531 = sbr.rel (%p529) target = $region48
        $region47: #{smiles_classifier_forward.1} parent=39 // pred_region
          %p532 = scmp.lt.s32.totalorder %s25, 1
          %s533 = scalar_select %p532, %s25, 1
          %s534 = scalar_lea.vmem %s5, %s533
        $region48: #{smiles_classifier_forward.1} parent=39 // pred_fallthru
          _
        // Predicated region
        $region49: #{smiles_classifier_forward.1} parent=39 // pred_check
          %p535 = pneg %p181
        $region50: #{smiles_classifier_forward.1} parent=39 // pred_check_branch
          %537 = sbr.rel (%p535) target = $region52
        $region51: #{smiles_classifier_forward.1} parent=39 // pred_region
          %p538 = scmp.lt.s32.totalorder %s25, 1
          %s539 = scalar_select %p538, %s25, 1
          %s540 = smul.addr %s539, 4
          %s541 = smul.addr %s540, 8
          %s542 = scalar_lea.vmem %s6, %s541
        $region52: #{smiles_classifier_forward.1} parent=39 // pred_fallthru
          _
        // Predicated region
        $region53: #{smiles_classifier_forward.1} parent=39 // pred_check
          %p543 = pneg %p207
        $region54: #{smiles_classifier_forward.1} parent=39 // pred_check_branch
          %545 = sbr.rel (%p543) target = $region56
        $region55: #{smiles_classifier_forward.1} parent=39 // pred_region
          %p546 = scmp.lt.s32.totalorder %s25, 1
          %s547 = scalar_select %p546, %s25, 1
          %s548 = scalar_lea.vmem %s7, %s547
        $region56: #{smiles_classifier_forward.1} parent=39 // pred_fallthru
          _
        // Predicated region
        $region57: #{smiles_classifier_forward.1} parent=39 // pred_check
          %p549 = pneg %p233
        $region58: #{smiles_classifier_forward.1} parent=39 // pred_check_branch
          %551 = sbr.rel (%p549) target = $region60
        $region59: #{smiles_classifier_forward.1} parent=39 // pred_region
          %p552 = scmp.lt.s32.totalorder %s25, 1
          %s553 = scalar_select %p552, %s25, 1
          %s554 = scalar_lea.vmem %s8, %s553
        $region60: #{smiles_classifier_forward.1} parent=39 // pred_fallthru
          _
        // Predicated region
        $region61: #{smiles_classifier_forward.1} parent=39 // pred_check
          %p555 = pneg %p259
        $region62: #{smiles_classifier_forward.1} parent=39 // pred_check_branch
          %557 = sbr.rel (%p555) target = $region64
        $region63: #{smiles_classifier_forward.1} parent=39 // pred_region
          %p558 = scmp.lt.s32.totalorder %s25, 1
          %s559 = scalar_select %p558, %s25, 1
          %s560 = scalar_lea.vmem %s9, %s559
        $region64: #{smiles_classifier_forward.1} parent=39 // pred_fallthru
          _
        // Predicated region
        $region65: #{smiles_classifier_forward.1} parent=39 // pred_check
          %p561 = pneg %p285
        $region66: #{smiles_classifier_forward.1} parent=39 // pred_check_branch
          %563 = sbr.rel (%p561) target = $region68
        $region67: #{smiles_classifier_forward.1} parent=39 // pred_region
          %p564 = scmp.lt.s32.totalorder %s25, 1
          %s565 = scalar_select %p564, %s25, 1
          %s566 = smul.addr %s565, 4
          %s567 = smul.addr %s566, 8
          %s568 = scalar_lea.vmem %s10, %s567
        $region68: #{smiles_classifier_forward.1} parent=39 // pred_fallthru
          _
        // Predicated region
        $region69: #{smiles_classifier_forward.1} parent=39 // pred_check
          %p569 = pneg %p311
        $region70: #{smiles_classifier_forward.1} parent=39 // pred_check_branch
          %571 = sbr.rel (%p569) target = $region72
        $region71: #{smiles_classifier_forward.1} parent=39 // pred_region
          %p572 = scmp.lt.s32.totalorder %s25, 1
          %s573 = scalar_select %p572, %s25, 1
          %s574 = scalar_lea.vmem %s11, %s573
        $region72: #{smiles_classifier_forward.1} parent=39 // pred_fallthru
          _
        // Predicated region
        $region73: #{smiles_classifier_forward.1} parent=39 // pred_check
          %p575 = pneg %p337
        $region74: #{smiles_classifier_forward.1} parent=39 // pred_check_branch
          %577 = sbr.rel (%p575) target = $region76
        $region75: #{smiles_classifier_forward.1} parent=39 // pred_region
          %p578 = scmp.lt.s32.totalorder %s25, 1
          %s579 = scalar_select %p578, %s25, 1
          %s580 = smul.addr %s579, 8
          %s581 = smul.addr %s580, 8
          %s582 = scalar_lea.vmem %s12, %s581
        $region76: #{smiles_classifier_forward.1} parent=39 // pred_fallthru
          _
        // Predicated region
        $region77: #{smiles_classifier_forward.1} parent=39 // pred_check
          %p583 = pneg %p363
        $region78: #{smiles_classifier_forward.1} parent=39 // pred_check_branch
          %585 = sbr.rel (%p583) target = $region80
        $region79: #{smiles_classifier_forward.1} parent=39 // pred_region
          %p586 = scmp.lt.s32.totalorder %s25, 1
          %s587 = scalar_select %p586, %s25, 1
          %s588 = scalar_lea.vmem %s13, %s587
        $region80: #{smiles_classifier_forward.1} parent=39 // pred_fallthru
          _
        // Predicated region
        $region81: #{smiles_classifier_forward.1} parent=39 // pred_check
          %p589 = pneg %p389
        $region82: #{smiles_classifier_forward.1} parent=39 // pred_check_branch
          %591 = sbr.rel (%p589) target = $region84
        $region83: #{smiles_classifier_forward.1} parent=39 // pred_region
          %p592 = scmp.lt.s32.totalorder %s25, 1
          %s593 = scalar_select %p592, %s25, 1
          %s594 = scalar_lea.vmem %s14, %s593
        $region84: #{smiles_classifier_forward.1} parent=39 // pred_fallthru
          _
        // Predicated region
        $region85: #{smiles_classifier_forward.1} parent=39 // pred_check
          %p595 = pneg %p415
        $region86: #{smiles_classifier_forward.1} parent=39 // pred_check_branch
          %597 = sbr.rel (%p595) target = $region88
        $region87: #{smiles_classifier_forward.1} parent=39 // pred_region
          %p598 = scmp.lt.s32.totalorder %s25, 1
          %s599 = scalar_select %p598, %s25, 1
          %s600 = scalar_lea.vmem %s15, %s599
        $region88: #{smiles_classifier_forward.1} parent=39 // pred_fallthru
          _
      $region40: #{smiles_classifier_forward.1} parent=5 // pred_fallthru
        _
      %p601 = scmp.le.s32.totalorder 1, %s25
      %p602 = scmp.lt.s32.totalorder %s25, 3
      %p603 = pnand %p601, %p602
      %p604 = pneg %p603
      // Predicated region
      $region89: #{smiles_classifier_forward.1} parent=5 // pred_check
        _
      $region90: #{smiles_classifier_forward.1} parent=5 // pred_check_branch
        %606 = sbr.rel (%p603) target = $region92
      $region91: #{smiles_classifier_forward.1} parent=5 // pred_region
        %s607 = ssub.s32 %s25, 1
        %p608 = pneg %p46
        %p609 = pneg %p43
        %p610 = pneg %p67
        %p611 = pneg %p64
        %p612 = pneg %p88
        %p613 = pneg %p85
        %p614 = pneg %p109
        %p615 = pneg %p106
        %p616 = scmp.lt.s32.totalorder %s30, 1
        %s617 = scalar_select %p616, %s30, 1
        %s618 = smul.addr %s617, 4
        %s619 = smul.addr %s618, 8
        %s620 = scalar_lea.vmem %s4, %s619
        %p621 = pneg %p135
        %p622 = pneg %p132
        %p623 = scmp.lt.s32.totalorder %s30, 1
        %s624 = scalar_select %p623, %s30, 1
        %s625 = scalar_lea.vmem %s5, %s624
        %p626 = pneg %p161
        %p627 = pneg %p158
        %p628 = scmp.lt.s32.totalorder %s30, 1
        %s629 = scalar_select %p628, %s30, 1
        %s630 = smul.addr %s629, 4
        %s631 = smul.addr %s630, 8
        %s632 = scalar_lea.vmem %s6, %s631
        %p633 = pneg %p187
        %p634 = pneg %p184
        %p635 = scmp.lt.s32.totalorder %s30, 1
        %s636 = scalar_select %p635, %s30, 1
        %s637 = scalar_lea.vmem %s7, %s636
        %p638 = pneg %p213
        %p639 = pneg %p210
        %p640 = scmp.lt.s32.totalorder %s30, 1
        %s641 = scalar_select %p640, %s30, 1
        %s642 = scalar_lea.vmem %s8, %s641
        %p643 = pneg %p239
        %p644 = pneg %p236
        %p645 = scmp.lt.s32.totalorder %s30, 1
        %s646 = scalar_select %p645, %s30, 1
        %s647 = scalar_lea.vmem %s9, %s646
        %p648 = pneg %p265
        %p649 = pneg %p262
        %p650 = scmp.lt.s32.totalorder %s30, 1
        %s651 = scalar_select %p650, %s30, 1
        %s652 = smul.addr %s651, 4
        %s653 = smul.addr %s652, 8
        %s654 = scalar_lea.vmem %s10, %s653
        %p655 = pneg %p291
        %p656 = pneg %p288
        %p657 = scmp.lt.s32.totalorder %s30, 1
        %s658 = scalar_select %p657, %s30, 1
        %s659 = scalar_lea.vmem %s11, %s658
        %p660 = pneg %p317
        %p661 = pneg %p314
        %p662 = scmp.lt.s32.totalorder %s30, 1
        %s663 = scalar_select %p662, %s30, 1
        %s664 = smul.addr %s663, 8
        %s665 = smul.addr %s664, 8
        %s666 = scalar_lea.vmem %s12, %s665
        %p667 = pneg %p343
        %p668 = pneg %p340
        %p669 = scmp.lt.s32.totalorder %s30, 1
        %s670 = scalar_select %p669, %s30, 1
        %s671 = scalar_lea.vmem %s13, %s670
        %p672 = pneg %p369
        %p673 = pneg %p366
        %p674 = scmp.lt.s32.totalorder %s30, 1
        %s675 = scalar_select %p674, %s30, 1
        %s676 = scalar_lea.vmem %s14, %s675
        %p677 = pneg %p395
        %p678 = pneg %p392
        %p679 = scmp.lt.s32.totalorder %s30, 1
        %s680 = scalar_select %p679, %s30, 1
        %s681 = scalar_lea.vmem %s15, %s680
        %p682 = pneg %p421
        %p683 = pneg %p418
        %p684 = pneg %p442
        %p685 = pneg %p439
        %p686 = pneg %p463
        %p687 = pneg %p460
        %p688 = pneg %p484
        %p689 = pneg %p481
        %p690 = scmp.lt.s32.totalorder %s30, 1
        %s691 = scalar_select %p690, %s30, 1
        %s692 = smul.addr %s691, 4
        %s693 = smul.addr %s692, 8
        %s694 = scalar_lea.vmem %s4, %s693
        %p695 = scmp.lt.s32.totalorder %s30, 1
        %s696 = scalar_select %p695, %s30, 1
        %s697 = scalar_lea.vmem %s5, %s696
        %p698 = scmp.lt.s32.totalorder %s30, 1
        %s699 = scalar_select %p698, %s30, 1
        %s700 = smul.addr %s699, 4
        %s701 = smul.addr %s700, 8
        %s702 = scalar_lea.vmem %s6, %s701
        %p703 = scmp.lt.s32.totalorder %s30, 1
        %s704 = scalar_select %p703, %s30, 1
        %s705 = scalar_lea.vmem %s7, %s704
        %p706 = scmp.lt.s32.totalorder %s30, 1
        %s707 = scalar_select %p706, %s30, 1
        %s708 = scalar_lea.vmem %s8, %s707
        %p709 = scmp.lt.s32.totalorder %s30, 1
        %s710 = scalar_select %p709, %s30, 1
        %s711 = scalar_lea.vmem %s9, %s710
        %p712 = scmp.lt.s32.totalorder %s30, 1
        %s713 = scalar_select %p712, %s30, 1
        %s714 = smul.addr %s713, 4
        %s715 = smul.addr %s714, 8
        %s716 = scalar_lea.vmem %s10, %s715
        %p717 = scmp.lt.s32.totalorder %s30, 1
        %s718 = scalar_select %p717, %s30, 1
        %s719 = scalar_lea.vmem %s11, %s718
        %p720 = scmp.lt.s32.totalorder %s30, 1
        %s721 = scalar_select %p720, %s30, 1
        %s722 = smul.addr %s721, 8
        %s723 = smul.addr %s722, 8
        %s724 = scalar_lea.vmem %s12, %s723
        %p725 = scmp.lt.s32.totalorder %s30, 1
        %s726 = scalar_select %p725, %s30, 1
        %s727 = scalar_lea.vmem %s13, %s726
        %p728 = scmp.lt.s32.totalorder %s30, 1
        %s729 = scalar_select %p728, %s30, 1
        %s730 = scalar_lea.vmem %s14, %s729
        %p731 = scmp.lt.s32.totalorder %s30, 1
        %s732 = scalar_select %p731, %s30, 1
        %s733 = scalar_lea.vmem %s15, %s732
        %p734 = scmp.eq.s32.totalorder %s30, 0
        // Predicated region
        $region93: #{smiles_classifier_forward.1} parent=91 // pred_check
          %p735 = pneg %p734
        $region94: #{smiles_classifier_forward.1} parent=91 // pred_check_branch
          %737 = sbr.rel (%p735) target = $region96
        $region95: #{smiles_classifier_forward.1} parent=91 // pred_region
          %v738 = vld [vmem:[%s0] sm:$0xff]
          %v739 = vld [vmem:[%s0 + $0x8] sm:$0xff]
          %v740 = vld [vmem:[%s2] sm:$0x1]
          %v741 = vld [vmem:[%s3] sm:$0x1]
          %vm742 = vcmask 261120
          %v743 = vsel %vm742, %v738, 0.0
          %744 = vadd.xlane.f32.xlu0 %v743
          %v745 = vpop.xlane.xlu0 %744
          %v746 = vsel %vm742, %v739, 0.0
          %747 = vadd.xlane.f32.xlu0 %v746
          %v748 = vpop.xlane.xlu0 %747
          %v749 = vrcp.pop 32.0
          %v750 = vmul.f32 32.0, %v749
          %v751 = vsub.f32 1.0, %v750
          %v752 = vmul.f32 %v749, %v751
          %v753 = vadd.f32 %v749, %v752
          %vm754 = vweird.f32 %v749
          %v755 = vsel %vm754, %v749, %v753
          %v756 = vmul.f32 %v745, %v755
          %v757 = vmul.f32 %v748, %v755
          %v758 = vsub.f32 %v738, %v756
          %v759 = vsub.f32 %v739, %v757
          %v760 = vmul.f32 %v758, %v758
          %v761 = vmul.f32 %v759, %v759
          %v762 = vsel %vm742, %v760, 0.0
          %763 = vadd.xlane.f32.xlu0 %v762
          %v764 = vpop.xlane.xlu0 %763
          %v765 = vsel %vm742, %v761, 0.0
          %766 = vadd.xlane.f32.xlu0 %v765
          %v767 = vpop.xlane.xlu0 %766
          %v768 = vmul.f32 %v764, %v755
          %v769 = vmul.f32 %v767, %v755
          %v770 = vadd.f32 %v768, 1e-12
          %v771 = vadd.f32 %v769, 1e-12
          %v772 = vrsqrt.pop %v770
          %v773 = vmul.f32 %v772, %v770
          %v774 = vmul.f32 %v773, %v772
          %v775 = vmul.f32 0.5, %v774
          %v776 = vsub.f32 1.5, %v775
          %v777 = vmul.f32 %v772, %v776
          %vm778 = vweird.f32 %v770
          %vm779 = vweird.f32 %v772
          %vm780 = vmor %vm778, %vm779
          %v781 = vsel %vm780, %v772, %v777
          %v782 = vrsqrt.pop %v771
          %v783 = vmul.f32 %v782, %v771
          %v784 = vmul.f32 %v783, %v782
          %v785 = vmul.f32 0.5, %v784
          %v786 = vsub.f32 1.5, %v785
          %v787 = vmul.f32 %v782, %v786
          %vm788 = vweird.f32 %v771
          %vm789 = vweird.f32 %v782
          %vm790 = vmor %vm788, %vm789
          %v791 = vsel %vm790, %v782, %v787
          %v792 = vmul.f32 %v758, %v781
          %v793 = vmul.f32 %v759, %v791
          %v795 = vperm.slane %v740, 0
          %v797 = vmul.f32 %v792, %v795
          %v798 = vmul.f32 %v793, %v795
          %v800 = vperm.slane %v741, 0
          %v802 = vadd.f32 %v797, %v800
          %v803 = vadd.f32 %v798, %v800
          %804 = vst.msk [vmem:[#allocation2] sm:$0xff] %vm742, %v802
          %805 = vst.msk [vmem:[#allocation2 + $0x8] sm:$0xff] %vm742, %v803
        $region96: #{smiles_classifier_forward.1} parent=91 // pred_fallthru
          _
        %v806 = vld [vmem:[#allocation2] sm:$0xff]
        %v807 = vld [vmem:[#allocation2 + $0x8] sm:$0xff]
        %v808 = vld [vmem:[%s1] sm:$0x1]
        %v809 = vld [vmem:[%s1 + $0x1] sm:$0x1]
        %v810 = vld [vmem:[%s694] sm:$0xff]
        %v811 = vld [vmem:[%s694 + $0x8] sm:$0xff]
        %v812 = vld [vmem:[%s694 + $0x10] sm:$0xff]
        %v813 = vld [vmem:[%s694 + $0x18] sm:$0xff]
        %v814 = vld [vmem:[%s697] sm:$0x1]
        %v816 = vperm.slane %v814, 0
        %vm818 = vcmask 261120
        %v820 = vsel %vm818, %v806, 0
        %v823 = vsel %vm818, %v807, 0
        %825 = vmatpush.msra.mxu0 0.0
        %826 = vmatpush.msra.mxu0 0.0
        %827 = vmatpush.msra.mxu0 0.0
        %828 = vmatpush.msra.mxu0 0.0
        %829 = vmatpush.msra.mxu0 0.0
        %830 = vmatpush.msra.mxu0 0.0
        %831 = vmatpush.msra.mxu0 0.0
        %832 = vmatpush.msra.mxu0 0.0
        %833 = vmatpush.msra.mxu0 0.0
        %834 = vmatpush.msra.mxu0 0.0
        %835 = vmatpush.msra.mxu0 0.0
        %836 = vmatpush.msra.mxu0 0.0
        %837 = vmatpush.msra.mxu0 %v813
        %838 = vmatpush.msra.mxu0 %v812
        %839 = vmatpush.msra.mxu0 %v811
        %840 = vmatpush.msra.mxu0 %v810
        %841 = vmatmul.f32.gmra.mxu0 %v820
        %v842 = vpop.f32.mrf.mxu0
        %v843 = vadd.f32 %v816, %v842
        %844 = vmatmul.f32.gmra.mxu0 %v823
        %v845 = vpop.f32.mrf.mxu0
        %v846 = vadd.f32 %v816, %v845
        %847 = vdwg.mxu0
        %v850 = vperm.slane %v808, 0
        %v851 = vperm.slane %v809, 0
        %855 = vrot.lane.b32.xlu0 %v843, 96
        %v856 = vpop.permute.xlu0 %855
        %vm857 = vcmask 64512
        %v858 = vsel %vm857, %v843, 0
        %v860 = vsel %vm857, %v856, 0
        %862 = vmatpush.xpose.msra.mxu0 0.0
        %863 = vmatpush.xpose.msra.mxu0 0.0
        %864 = vmatpush.xpose.msra.mxu0 0.0
        %865 = vmatpush.xpose.msra.mxu0 0.0
        %866 = vmatpush.xpose.msra.mxu0 0.0
        %867 = vmatpush.xpose.msra.mxu0 0.0
        %868 = vmatpush.xpose.msra.mxu0 0.0
        %869 = vmatpush.xpose.msra.mxu0 0.0
        %870 = vmatpush.xpose.msra.mxu0 0.0
        %871 = vmatpush.xpose.msra.mxu0 0.0
        %872 = vmatpush.xpose.msra.mxu0 0.0
        %873 = vmatpush.xpose.msra.mxu0 0.0
        %874 = vmatpush.xpose.msra.mxu0 0.0
        %875 = vmatpush.xpose.msra.mxu0 0.0
        %876 = vmatpush.xpose.msra.mxu0 0.0
        %877 = vmatpush.xpose.msra.mxu0 %v860
        %878 = vmatmul.f32.gmra.mxu0 %v858
        %v879 = vpop.f32.mrf.mxu0
        %v880 = vadd.f32 %v850, %v879
        %881 = vdwg.mxu0
        %883 = vrot.lane.b32.xlu0 %v846, 96
        %v884 = vpop.permute.xlu0 %883
        %v885 = vsel %vm857, %v846, 0
        %v887 = vsel %vm857, %v884, 0
        %889 = vmatpush.xpose.msra.mxu0 0.0
        %890 = vmatpush.xpose.msra.mxu0 0.0
        %891 = vmatpush.xpose.msra.mxu0 0.0
        %892 = vmatpush.xpose.msra.mxu0 0.0
        %893 = vmatpush.xpose.msra.mxu0 0.0
        %894 = vmatpush.xpose.msra.mxu0 0.0
        %895 = vmatpush.xpose.msra.mxu0 0.0
        %896 = vmatpush.xpose.msra.mxu0 0.0
        %897 = vmatpush.xpose.msra.mxu0 0.0
        %898 = vmatpush.xpose.msra.mxu0 0.0
        %899 = vmatpush.xpose.msra.mxu0 0.0
        %900 = vmatpush.xpose.msra.mxu0 0.0
        %901 = vmatpush.xpose.msra.mxu0 0.0
        %902 = vmatpush.xpose.msra.mxu0 0.0
        %903 = vmatpush.xpose.msra.mxu0 0.0
        %904 = vmatpush.xpose.msra.mxu0 %v887
        %905 = vmatmul.f32.gmra.mxu0 %v885
        %v906 = vpop.f32.mrf.mxu0
        %v907 = vadd.f32 %v851, %v906
        %908 = vdwg.mxu0
        %v909 = vsel %vm857, %v880, -inf
        %910 = vmax.xlane.f32.xlu0 %v909
        %v911 = vpop.xlane.xlu0 %910
        %v912 = vsel %vm857, %v907, -inf
        %913 = vmax.xlane.f32.xlu0 %v912
        %v914 = vpop.xlane.xlu0 %913
        %v915 = vsub.f32 %v880, %v911
        %v916 = vsub.f32 %v907, %v914
        %v917 = vmul.f32 %v915, 1.442695
        %v918 = vpow.pop %v917
        %v919 = vmul.f32 %v916, 1.442695
        %v920 = vpow.pop %v919
        %v921 = vsel %vm857, %v918, 0.0
        %922 = vadd.xlane.f32.xlu0 %v921
        %v923 = vpop.xlane.xlu0 %922
        %v924 = vsel %vm857, %v920, 0.0
        %925 = vadd.xlane.f32.xlu0 %v924
        %v926 = vpop.xlane.xlu0 %925
        %v927 = vrcp.pop %v923
        %v928 = vrcp.pop %v926
        %v929 = vmul.f32 %v918, %v927
        %v930 = vmul.f32 %v920, %v928
        %931 = vrot.lane.b32.xlu0 %v843, 64
        %v932 = vpop.permute.xlu0 %931
        %v935 = vsel %vm857, %v929, 0
        %937 = vmatpush.msra.mxu0 0.0
        %938 = vmatpush.msra.mxu0 0.0
        %939 = vmatpush.msra.mxu0 0.0
        %940 = vmatpush.msra.mxu0 0.0
        %941 = vmatpush.msra.mxu0 0.0
        %942 = vmatpush.msra.mxu0 0.0
        %943 = vmatpush.msra.mxu0 0.0
        %944 = vmatpush.msra.mxu0 0.0
        %945 = vmatpush.msra.mxu0 0.0
        %946 = vmatpush.msra.mxu0 0.0
        %947 = vmatpush.msra.mxu0 0.0
        %948 = vmatpush.msra.mxu0 0.0
        %949 = vmatpush.msra.mxu0 0.0
        %950 = vmatpush.msra.mxu0 0.0
        %951 = vmatpush.msra.mxu0 0.0
        %952 = vmatpush.msra.mxu0 %v932
        %953 = vmatmul.f32.gmra.mxu0 %v935
        %v954 = vpop.f32.mrf.mxu0
        %v955 = vadd.f32 0.0, %v954
        %956 = vdwg.mxu0
        %957 = vrot.lane.b32.xlu0 %v846, 64
        %v958 = vpop.permute.xlu0 %957
        %v961 = vsel %vm857, %v930, 0
        %963 = vmatpush.msra.mxu0 0.0
        %964 = vmatpush.msra.mxu0 0.0
        %965 = vmatpush.msra.mxu0 0.0
        %966 = vmatpush.msra.mxu0 0.0
        %967 = vmatpush.msra.mxu0 0.0
        %968 = vmatpush.msra.mxu0 0.0
        %969 = vmatpush.msra.mxu0 0.0
        %970 = vmatpush.msra.mxu0 0.0
        %971 = vmatpush.msra.mxu0 0.0
        %972 = vmatpush.msra.mxu0 0.0
        %973 = vmatpush.msra.mxu0 0.0
        %974 = vmatpush.msra.mxu0 0.0
        %975 = vmatpush.msra.mxu0 0.0
        %976 = vmatpush.msra.mxu0 0.0
        %977 = vmatpush.msra.mxu0 0.0
        %978 = vmatpush.msra.mxu0 %v958
        %979 = vmatmul.f32.gmra.mxu0 %v961
        %v980 = vpop.f32.mrf.mxu0
        %v981 = vadd.f32 0.0, %v980
        %982 = vdwg.mxu0
        %983 = vrot.lane.b32.xlu0 %v843, 120
        %v984 = vpop.permute.xlu0 %983
        %985 = vrot.lane.b32.xlu0 %v843, 88
        %v986 = vpop.permute.xlu0 %985
        %v987 = vsel %vm857, %v984, 0
        %v989 = vsel %vm857, %v986, 0
        %991 = vmatpush.xpose.msra.mxu0 0.0
        %992 = vmatpush.xpose.msra.mxu0 0.0
        %993 = vmatpush.xpose.msra.mxu0 0.0
        %994 = vmatpush.xpose.msra.mxu0 0.0
        %995 = vmatpush.xpose.msra.mxu0 0.0
        %996 = vmatpush.xpose.msra.mxu0 0.0
        %997 = vmatpush.xpose.msra.mxu0 0.0
        %998 = vmatpush.xpose.msra.mxu0 0.0
        %999 = vmatpush.xpose.msra.mxu0 0.0
        %1000 = vmatpush.xpose.msra.mxu0 0.0
        %1001 = vmatpush.xpose.msra.mxu0 0.0
        %1002 = vmatpush.xpose.msra.mxu0 0.0
        %1003 = vmatpush.xpose.msra.mxu0 0.0
        %1004 = vmatpush.xpose.msra.mxu0 0.0
        %1005 = vmatpush.xpose.msra.mxu0 0.0
        %1006 = vmatpush.xpose.msra.mxu0 %v989
        %1007 = vmatmul.f32.gmra.mxu0 %v987
        %v1008 = vpop.f32.mrf.mxu0
        %v1009 = vadd.f32 %v850, %v1008
        %1010 = vdwg.mxu0
        %1011 = vrot.lane.b32.xlu0 %v846, 120
        %v1012 = vpop.permute.xlu0 %1011
        %1013 = vrot.lane.b32.xlu0 %v846, 88
        %v1014 = vpop.permute.xlu0 %1013
        %v1015 = vsel %vm857, %v1012, 0
        %v1017 = vsel %vm857, %v1014, 0
        %1019 = vmatpush.xpose.msra.mxu0 0.0
        %1020 = vmatpush.xpose.msra.mxu0 0.0
        %1021 = vmatpush.xpose.msra.mxu0 0.0
        %1022 = vmatpush.xpose.msra.mxu0 0.0
        %1023 = vmatpush.xpose.msra.mxu0 0.0
        %1024 = vmatpush.xpose.msra.mxu0 0.0
        %1025 = vmatpush.xpose.msra.mxu0 0.0
        %1026 = vmatpush.xpose.msra.mxu0 0.0
        %1027 = vmatpush.xpose.msra.mxu0 0.0
        %1028 = vmatpush.xpose.msra.mxu0 0.0
        %1029 = vmatpush.xpose.msra.mxu0 0.0
        %1030 = vmatpush.xpose.msra.mxu0 0.0
        %1031 = vmatpush.xpose.msra.mxu0 0.0
        %1032 = vmatpush.xpose.msra.mxu0 0.0
        %1033 = vmatpush.xpose.msra.mxu0 0.0
        %1034 = vmatpush.xpose.msra.mxu0 %v1017
        %1035 = vmatmul.f32.gmra.mxu0 %v1015
        %v1036 = vpop.f32.mrf.mxu0
        %v1037 = vadd.f32 %v851, %v1036
        %1038 = vdwg.mxu0
        %v1039 = vsel %vm857, %v1009, -inf
        %1040 = vmax.xlane.f32.xlu0 %v1039
        %v1041 = vpop.xlane.xlu0 %1040
        %v1042 = vsel %vm857, %v1037, -inf
        %1043 = vmax.xlane.f32.xlu0 %v1042
        %v1044 = vpop.xlane.xlu0 %1043
        %v1045 = vsub.f32 %v1009, %v1041
        %v1046 = vsub.f32 %v1037, %v1044
        %v1047 = vmul.f32 %v1045, 1.442695
        %v1048 = vpow.pop %v1047
        %v1049 = vmul.f32 %v1046, 1.442695
        %v1050 = vpow.pop %v1049
        %v1051 = vsel %vm857, %v1048, 0.0
        %1052 = vadd.xlane.f32.xlu0 %v1051
        %v1053 = vpop.xlane.xlu0 %1052
        %v1054 = vsel %vm857, %v1050, 0.0
        %1055 = vadd.xlane.f32.xlu0 %v1054
        %v1056 = vpop.xlane.xlu0 %1055
        %v1057 = vrcp.pop %v1053
        %v1058 = vrcp.pop %v1056
        %v1059 = vmul.f32 %v1048, %v1057
        %v1060 = vmul.f32 %v1050, %v1058
        %1061 = vrot.lane.b32.xlu0 %v843, 56
        %v1062 = vpop.permute.xlu0 %1061
        %v1065 = vsel %vm857, %v1059, 0
        %1067 = vmatpush.msra.mxu0 0.0
        %1068 = vmatpush.msra.mxu0 0.0
        %1069 = vmatpush.msra.mxu0 0.0
        %1070 = vmatpush.msra.mxu0 0.0
        %1071 = vmatpush.msra.mxu0 0.0
        %1072 = vmatpush.msra.mxu0 0.0
        %1073 = vmatpush.msra.mxu0 0.0
        %1074 = vmatpush.msra.mxu0 0.0
        %1075 = vmatpush.msra.mxu0 0.0
        %1076 = vmatpush.msra.mxu0 0.0
        %1077 = vmatpush.msra.mxu0 0.0
        %1078 = vmatpush.msra.mxu0 0.0
        %1079 = vmatpush.msra.mxu0 0.0
        %1080 = vmatpush.msra.mxu0 0.0
        %1081 = vmatpush.msra.mxu0 0.0
        %1082 = vmatpush.msra.mxu0 %v1062
        %1083 = vmatmul.f32.gmra.mxu0 %v1065
        %v1084 = vpop.f32.mrf.mxu0
        %v1085 = vadd.f32 0.0, %v1084
        %1086 = vdwg.mxu0
        %1087 = vrot.lane.b32.xlu0 %v846, 56
        %v1088 = vpop.permute.xlu0 %1087
        %v1091 = vsel %vm857, %v1060, 0
        %1093 = vmatpush.msra.mxu0 0.0
        %1094 = vmatpush.msra.mxu0 0.0
        %1095 = vmatpush.msra.mxu0 0.0
        %1096 = vmatpush.msra.mxu0 0.0
        %1097 = vmatpush.msra.mxu0 0.0
        %1098 = vmatpush.msra.mxu0 0.0
        %1099 = vmatpush.msra.mxu0 0.0
        %1100 = vmatpush.msra.mxu0 0.0
        %1101 = vmatpush.msra.mxu0 0.0
        %1102 = vmatpush.msra.mxu0 0.0
        %1103 = vmatpush.msra.mxu0 0.0
        %1104 = vmatpush.msra.mxu0 0.0
        %1105 = vmatpush.msra.mxu0 0.0
        %1106 = vmatpush.msra.mxu0 0.0
        %1107 = vmatpush.msra.mxu0 0.0
        %1108 = vmatpush.msra.mxu0 %v1088
        %1109 = vmatmul.f32.gmra.mxu0 %v1091
        %v1110 = vpop.f32.mrf.mxu0
        %v1111 = vadd.f32 0.0, %v1110
        %1112 = vdwg.mxu0
        %1113 = vrot.lane.b32.xlu0 %v843, 112
        %v1114 = vpop.permute.xlu0 %1113
        %1115 = vrot.lane.b32.xlu0 %v843, 80
        %v1116 = vpop.permute.xlu0 %1115
        %v1117 = vsel %vm857, %v1114, 0
        %v1119 = vsel %vm857, %v1116, 0
        %1121 = vmatpush.xpose.msra.mxu0 0.0
        %1122 = vmatpush.xpose.msra.mxu0 0.0
        %1123 = vmatpush.xpose.msra.mxu0 0.0
        %1124 = vmatpush.xpose.msra.mxu0 0.0
        %1125 = vmatpush.xpose.msra.mxu0 0.0
        %1126 = vmatpush.xpose.msra.mxu0 0.0
        %1127 = vmatpush.xpose.msra.mxu0 0.0
        %1128 = vmatpush.xpose.msra.mxu0 0.0
        %1129 = vmatpush.xpose.msra.mxu0 0.0
        %1130 = vmatpush.xpose.msra.mxu0 0.0
        %1131 = vmatpush.xpose.msra.mxu0 0.0
        %1132 = vmatpush.xpose.msra.mxu0 0.0
        %1133 = vmatpush.xpose.msra.mxu0 0.0
        %1134 = vmatpush.xpose.msra.mxu0 0.0
        %1135 = vmatpush.xpose.msra.mxu0 0.0
        %1136 = vmatpush.xpose.msra.mxu0 %v1119
        %1137 = vmatmul.f32.gmra.mxu0 %v1117
        %v1138 = vpop.f32.mrf.mxu0
        %v1139 = vadd.f32 %v850, %v1138
        %1140 = vdwg.mxu0
        %1141 = vrot.lane.b32.xlu0 %v846, 112
        %v1142 = vpop.permute.xlu0 %1141
        %1143 = vrot.lane.b32.xlu0 %v846, 80
        %v1144 = vpop.permute.xlu0 %1143
        %v1145 = vsel %vm857, %v1142, 0
        %v1147 = vsel %vm857, %v1144, 0
        %1149 = vmatpush.xpose.msra.mxu0 0.0
        %1150 = vmatpush.xpose.msra.mxu0 0.0
        %1151 = vmatpush.xpose.msra.mxu0 0.0
        %1152 = vmatpush.xpose.msra.mxu0 0.0
        %1153 = vmatpush.xpose.msra.mxu0 0.0
        %1154 = vmatpush.xpose.msra.mxu0 0.0
        %1155 = vmatpush.xpose.msra.mxu0 0.0
        %1156 = vmatpush.xpose.msra.mxu0 0.0
        %1157 = vmatpush.xpose.msra.mxu0 0.0
        %1158 = vmatpush.xpose.msra.mxu0 0.0
        %1159 = vmatpush.xpose.msra.mxu0 0.0
        %1160 = vmatpush.xpose.msra.mxu0 0.0
        %1161 = vmatpush.xpose.msra.mxu0 0.0
        %1162 = vmatpush.xpose.msra.mxu0 0.0
        %1163 = vmatpush.xpose.msra.mxu0 0.0
        %1164 = vmatpush.xpose.msra.mxu0 %v1147
        %1165 = vmatmul.f32.gmra.mxu0 %v1145
        %v1166 = vpop.f32.mrf.mxu0
        %v1167 = vadd.f32 %v851, %v1166
        %1168 = vdwg.mxu0
        %v1169 = vsel %vm857, %v1139, -inf
        %1170 = vmax.xlane.f32.xlu0 %v1169
        %v1171 = vpop.xlane.xlu0 %1170
        %v1172 = vsel %vm857, %v1167, -inf
        %1173 = vmax.xlane.f32.xlu0 %v1172
        %v1174 = vpop.xlane.xlu0 %1173
        %v1175 = vsub.f32 %v1139, %v1171
        %v1176 = vsub.f32 %v1167, %v1174
        %v1177 = vmul.f32 %v1175, 1.442695
        %v1178 = vpow.pop %v1177
        %v1179 = vmul.f32 %v1176, 1.442695
        %v1180 = vpow.pop %v1179
        %v1181 = vsel %vm857, %v1178, 0.0
        %1182 = vadd.xlane.f32.xlu0 %v1181
        %v1183 = vpop.xlane.xlu0 %1182
        %v1184 = vsel %vm857, %v1180, 0.0
        %1185 = vadd.xlane.f32.xlu0 %v1184
        %v1186 = vpop.xlane.xlu0 %1185
        %v1187 = vrcp.pop %v1183
        %v1188 = vrcp.pop %v1186
        %v1189 = vmul.f32 %v1178, %v1187
        %v1190 = vmul.f32 %v1180, %v1188
        %1191 = vrot.lane.b32.xlu0 %v843, 48
        %v1192 = vpop.permute.xlu0 %1191
        %v1195 = vsel %vm857, %v1189, 0
        %1197 = vmatpush.msra.mxu0 0.0
        %1198 = vmatpush.msra.mxu0 0.0
        %1199 = vmatpush.msra.mxu0 0.0
        %1200 = vmatpush.msra.mxu0 0.0
        %1201 = vmatpush.msra.mxu0 0.0
        %1202 = vmatpush.msra.mxu0 0.0
        %1203 = vmatpush.msra.mxu0 0.0
        %1204 = vmatpush.msra.mxu0 0.0
        %1205 = vmatpush.msra.mxu0 0.0
        %1206 = vmatpush.msra.mxu0 0.0
        %1207 = vmatpush.msra.mxu0 0.0
        %1208 = vmatpush.msra.mxu0 0.0
        %1209 = vmatpush.msra.mxu0 0.0
        %1210 = vmatpush.msra.mxu0 0.0
        %1211 = vmatpush.msra.mxu0 0.0
        %1212 = vmatpush.msra.mxu0 %v1192
        %1213 = vmatmul.f32.gmra.mxu0 %v1195
        %v1214 = vpop.f32.mrf.mxu0
        %v1215 = vadd.f32 0.0, %v1214
        %1216 = vdwg.mxu0
        %1217 = vrot.lane.b32.xlu0 %v846, 48
        %v1218 = vpop.permute.xlu0 %1217
        %v1221 = vsel %vm857, %v1190, 0
        %1223 = vmatpush.msra.mxu0 0.0
        %1224 = vmatpush.msra.mxu0 0.0
        %1225 = vmatpush.msra.mxu0 0.0
        %1226 = vmatpush.msra.mxu0 0.0
        %1227 = vmatpush.msra.mxu0 0.0
        %1228 = vmatpush.msra.mxu0 0.0
        %1229 = vmatpush.msra.mxu0 0.0
        %1230 = vmatpush.msra.mxu0 0.0
        %1231 = vmatpush.msra.mxu0 0.0
        %1232 = vmatpush.msra.mxu0 0.0
        %1233 = vmatpush.msra.mxu0 0.0
        %1234 = vmatpush.msra.mxu0 0.0
        %1235 = vmatpush.msra.mxu0 0.0
        %1236 = vmatpush.msra.mxu0 0.0
        %1237 = vmatpush.msra.mxu0 0.0
        %1238 = vmatpush.msra.mxu0 %v1218
        %1239 = vmatmul.f32.gmra.mxu0 %v1221
        %v1240 = vpop.f32.mrf.mxu0
        %v1241 = vadd.f32 0.0, %v1240
        %1242 = vdwg.mxu0
        %1243 = vrot.lane.b32.xlu0 %v843, 104
        %v1244 = vpop.permute.xlu0 %1243
        %1245 = vrot.lane.b32.xlu0 %v843, 72
        %v1246 = vpop.permute.xlu0 %1245
        %v1247 = vsel %vm857, %v1244, 0
        %v1249 = vsel %vm857, %v1246, 0
        %1251 = vmatpush.xpose.msra.mxu0 0.0
        %1252 = vmatpush.xpose.msra.mxu0 0.0
        %1253 = vmatpush.xpose.msra.mxu0 0.0
        %1254 = vmatpush.xpose.msra.mxu0 0.0
        %1255 = vmatpush.xpose.msra.mxu0 0.0
        %1256 = vmatpush.xpose.msra.mxu0 0.0
        %1257 = vmatpush.xpose.msra.mxu0 0.0
        %1258 = vmatpush.xpose.msra.mxu0 0.0
        %1259 = vmatpush.xpose.msra.mxu0 0.0
        %1260 = vmatpush.xpose.msra.mxu0 0.0
        %1261 = vmatpush.xpose.msra.mxu0 0.0
        %1262 = vmatpush.xpose.msra.mxu0 0.0
        %1263 = vmatpush.xpose.msra.mxu0 0.0
        %1264 = vmatpush.xpose.msra.mxu0 0.0
        %1265 = vmatpush.xpose.msra.mxu0 0.0
        %1266 = vmatpush.xpose.msra.mxu0 %v1249
        %1267 = vmatmul.f32.gmra.mxu0 %v1247
        %v1268 = vpop.f32.mrf.mxu0
        %v1269 = vadd.f32 %v850, %v1268
        %1270 = vdwg.mxu0
        %1271 = vrot.lane.b32.xlu0 %v846, 104
        %v1272 = vpop.permute.xlu0 %1271
        %1273 = vrot.lane.b32.xlu0 %v846, 72
        %v1274 = vpop.permute.xlu0 %1273
        %v1275 = vsel %vm857, %v1272, 0
        %v1277 = vsel %vm857, %v1274, 0
        %1279 = vmatpush.xpose.msra.mxu0 0.0
        %1280 = vmatpush.xpose.msra.mxu0 0.0
        %1281 = vmatpush.xpose.msra.mxu0 0.0
        %1282 = vmatpush.xpose.msra.mxu0 0.0
        %1283 = vmatpush.xpose.msra.mxu0 0.0
        %1284 = vmatpush.xpose.msra.mxu0 0.0
        %1285 = vmatpush.xpose.msra.mxu0 0.0
        %1286 = vmatpush.xpose.msra.mxu0 0.0
        %1287 = vmatpush.xpose.msra.mxu0 0.0
        %1288 = vmatpush.xpose.msra.mxu0 0.0
        %1289 = vmatpush.xpose.msra.mxu0 0.0
        %1290 = vmatpush.xpose.msra.mxu0 0.0
        %1291 = vmatpush.xpose.msra.mxu0 0.0
        %1292 = vmatpush.xpose.msra.mxu0 0.0
        %1293 = vmatpush.xpose.msra.mxu0 0.0
        %1294 = vmatpush.xpose.msra.mxu0 %v1277
        %1295 = vmatmul.f32.gmra.mxu0 %v1275
        %v1296 = vpop.f32.mrf.mxu0
        %v1297 = vadd.f32 %v851, %v1296
        %1298 = vdwg.mxu0
        %v1299 = vsel %vm857, %v1269, -inf
        %1300 = vmax.xlane.f32.xlu0 %v1299
        %v1301 = vpop.xlane.xlu0 %1300
        %v1302 = vsel %vm857, %v1297, -inf
        %1303 = vmax.xlane.f32.xlu0 %v1302
        %v1304 = vpop.xlane.xlu0 %1303
        %v1305 = vsub.f32 %v1269, %v1301
        %v1306 = vsub.f32 %v1297, %v1304
        %v1307 = vmul.f32 %v1305, 1.442695
        %v1308 = vpow.pop %v1307
        %v1309 = vmul.f32 %v1306, 1.442695
        %v1310 = vpow.pop %v1309
        %v1311 = vsel %vm857, %v1308, 0.0
        %1312 = vadd.xlane.f32.xlu0 %v1311
        %v1313 = vpop.xlane.xlu0 %1312
        %v1314 = vsel %vm857, %v1310, 0.0
        %1315 = vadd.xlane.f32.xlu0 %v1314
        %v1316 = vpop.xlane.xlu0 %1315
        %v1317 = vrcp.pop %v1313
        %v1318 = vrcp.pop %v1316
        %v1319 = vmul.f32 %v1308, %v1317
        %v1320 = vmul.f32 %v1310, %v1318
        %1321 = vrot.lane.b32.xlu0 %v843, 40
        %v1322 = vpop.permute.xlu0 %1321
        %v1325 = vsel %vm857, %v1319, 0
        %1327 = vmatpush.msra.mxu0 0.0
        %1328 = vmatpush.msra.mxu0 0.0
        %1329 = vmatpush.msra.mxu0 0.0
        %1330 = vmatpush.msra.mxu0 0.0
        %1331 = vmatpush.msra.mxu0 0.0
        %1332 = vmatpush.msra.mxu0 0.0
        %1333 = vmatpush.msra.mxu0 0.0
        %1334 = vmatpush.msra.mxu0 0.0
        %1335 = vmatpush.msra.mxu0 0.0
        %1336 = vmatpush.msra.mxu0 0.0
        %1337 = vmatpush.msra.mxu0 0.0
        %1338 = vmatpush.msra.mxu0 0.0
        %1339 = vmatpush.msra.mxu0 0.0
        %1340 = vmatpush.msra.mxu0 0.0
        %1341 = vmatpush.msra.mxu0 0.0
        %1342 = vmatpush.msra.mxu0 %v1322
        %1343 = vmatmul.f32.gmra.mxu0 %v1325
        %v1344 = vpop.f32.mrf.mxu0
        %v1345 = vadd.f32 0.0, %v1344
        %1346 = vdwg.mxu0
        %1347 = vrot.lane.b32.xlu0 %v846, 40
        %v1348 = vpop.permute.xlu0 %1347
        %v1351 = vsel %vm857, %v1320, 0
        %1353 = vmatpush.msra.mxu0 0.0
        %1354 = vmatpush.msra.mxu0 0.0
        %1355 = vmatpush.msra.mxu0 0.0
        %1356 = vmatpush.msra.mxu0 0.0
        %1357 = vmatpush.msra.mxu0 0.0
        %1358 = vmatpush.msra.mxu0 0.0
        %1359 = vmatpush.msra.mxu0 0.0
        %1360 = vmatpush.msra.mxu0 0.0
        %1361 = vmatpush.msra.mxu0 0.0
        %1362 = vmatpush.msra.mxu0 0.0
        %1363 = vmatpush.msra.mxu0 0.0
        %1364 = vmatpush.msra.mxu0 0.0
        %1365 = vmatpush.msra.mxu0 0.0
        %1366 = vmatpush.msra.mxu0 0.0
        %1367 = vmatpush.msra.mxu0 0.0
        %1368 = vmatpush.msra.mxu0 %v1348
        %1369 = vmatmul.f32.gmra.mxu0 %v1351
        %v1370 = vpop.f32.mrf.mxu0
        %v1371 = vadd.f32 0.0, %v1370
        %1372 = vdwg.mxu0
        %1375 = vrot.lane.b32.xlu0 %v1085, 8
        %v1376 = vpop.permute.xlu0 %1375
        %1377 = vrot.lane.b32.xlu0 %v1111, 8
        %v1378 = vpop.permute.xlu0 %1377
        %1383 = vrot.lane.b32.xlu0 %v1215, 16
        %v1384 = vpop.permute.xlu0 %1383
        %1385 = vrot.lane.b32.xlu0 %v1241, 16
        %v1386 = vpop.permute.xlu0 %1385
        %1391 = vrot.lane.b32.xlu0 %v1345, 24
        %v1392 = vpop.permute.xlu0 %1391
        %1393 = vrot.lane.b32.xlu0 %v1371, 24
        %v1394 = vpop.permute.xlu0 %1393
        %v1397 = vsel %vm857, %v955, %v1376
        %v1398 = vsel %vm857, %v981, %v1378
        %vm1399 = vcmask 130048
        %v1400 = vsel %vm1399, %v1397, %v1384
        %v1401 = vsel %vm1399, %v1398, %v1386
        %vm1402 = vcmask 195584
        %v1403 = vsel %vm1402, %v1400, %v1392
        %v1404 = vsel %vm1402, %v1401, %v1394
        %v1405 = vld [vmem:[%s702] sm:$0xff]
        %v1406 = vld [vmem:[%s702 + $0x8] sm:$0xff]
        %v1407 = vld [vmem:[%s702 + $0x10] sm:$0xff]
        %v1408 = vld [vmem:[%s702 + $0x18] sm:$0xff]
        %v1409 = vld [vmem:[%s705] sm:$0x1]
        %v1411 = vperm.slane %v1409, 0
        %v1414 = vsel %vm818, %v1403, 0
        %v1417 = vsel %vm818, %v1404, 0
        %1419 = vmatpush.msra.mxu0 0.0
        %1420 = vmatpush.msra.mxu0 0.0
        %1421 = vmatpush.msra.mxu0 0.0
        %1422 = vmatpush.msra.mxu0 0.0
        %1423 = vmatpush.msra.mxu0 0.0
        %1424 = vmatpush.msra.mxu0 0.0
        %1425 = vmatpush.msra.mxu0 0.0
        %1426 = vmatpush.msra.mxu0 0.0
        %1427 = vmatpush.msra.mxu0 0.0
        %1428 = vmatpush.msra.mxu0 0.0
        %1429 = vmatpush.msra.mxu0 0.0
        %1430 = vmatpush.msra.mxu0 0.0
        %1431 = vmatpush.msra.mxu0 %v1408
        %1432 = vmatpush.msra.mxu0 %v1407
        %1433 = vmatpush.msra.mxu0 %v1406
        %1434 = vmatpush.msra.mxu0 %v1405
        %1435 = vmatmul.f32.gmra.mxu0 %v1414
        %v1436 = vpop.f32.mrf.mxu0
        %v1437 = vadd.f32 %v1411, %v1436
        %1438 = vmatmul.f32.gmra.mxu0 %v1417
        %v1439 = vpop.f32.mrf.mxu0
        %v1440 = vadd.f32 %v1411, %v1439
        %1441 = vdwg.mxu0
        %v1442 = vadd.f32 %v1437, %v806
        %v1443 = vadd.f32 %v1440, %v807
        %v1444 = vld [vmem:[%s708] sm:$0x1]
        %v1445 = vld [vmem:[%s711] sm:$0x1]
        %v1446 = vsel %vm818, %v1442, 0.0
        %1447 = vadd.xlane.f32.xlu0 %v1446
        %v1448 = vpop.xlane.xlu0 %1447
        %v1449 = vsel %vm818, %v1443, 0.0
        %1450 = vadd.xlane.f32.xlu0 %v1449
        %v1451 = vpop.xlane.xlu0 %1450
        %v1452 = vrcp.pop 32.0
        %v1453 = vmul.f32 32.0, %v1452
        %v1454 = vsub.f32 1.0, %v1453
        %v1455 = vmul.f32 %v1452, %v1454
        %v1456 = vadd.f32 %v1452, %v1455
        %vm1457 = vweird.f32 %v1452
        %v1458 = vsel %vm1457, %v1452, %v1456
        %v1459 = vmul.f32 %v1448, %v1458
        %v1460 = vmul.f32 %v1451, %v1458
        %v1461 = vsub.f32 %v1442, %v1459
        %v1462 = vsub.f32 %v1443, %v1460
        %v1463 = vmul.f32 %v1461, %v1461
        %v1464 = vmul.f32 %v1462, %v1462
        %v1465 = vsel %vm818, %v1463, 0.0
        %1466 = vadd.xlane.f32.xlu0 %v1465
        %v1467 = vpop.xlane.xlu0 %1466
        %v1468 = vsel %vm818, %v1464, 0.0
        %1469 = vadd.xlane.f32.xlu0 %v1468
        %v1470 = vpop.xlane.xlu0 %1469
        %v1471 = vmul.f32 %v1467, %v1458
        %v1472 = vmul.f32 %v1470, %v1458
        %v1473 = vadd.f32 %v1471, 1e-12
        %v1474 = vadd.f32 %v1472, 1e-12
        %v1475 = vrsqrt.pop %v1473
        %v1476 = vmul.f32 %v1475, %v1473
        %v1477 = vmul.f32 %v1476, %v1475
        %v1478 = vmul.f32 0.5, %v1477
        %v1479 = vsub.f32 1.5, %v1478
        %v1480 = vmul.f32 %v1475, %v1479
        %vm1481 = vweird.f32 %v1473
        %vm1482 = vweird.f32 %v1475
        %vm1483 = vmor %vm1481, %vm1482
        %v1484 = vsel %vm1483, %v1475, %v1480
        %v1485 = vrsqrt.pop %v1474
        %v1486 = vmul.f32 %v1485, %v1474
        %v1487 = vmul.f32 %v1486, %v1485
        %v1488 = vmul.f32 0.5, %v1487
        %v1489 = vsub.f32 1.5, %v1488
        %v1490 = vmul.f32 %v1485, %v1489
        %vm1491 = vweird.f32 %v1474
        %vm1492 = vweird.f32 %v1485
        %vm1493 = vmor %vm1491, %vm1492
        %v1494 = vsel %vm1493, %v1485, %v1490
        %v1495 = vmul.f32 %v1461, %v1484
        %v1496 = vmul.f32 %v1462, %v1494
        %v1498 = vperm.slane %v1444, 0
        %v1500 = vmul.f32 %v1495, %v1498
        %v1501 = vmul.f32 %v1496, %v1498
        %v1503 = vperm.slane %v1445, 0
        %v1505 = vadd.f32 %v1500, %v1503
        %v1506 = vadd.f32 %v1501, %v1503
        %v1507 = vld [vmem:[%s716] sm:$0xff]
        %v1508 = vld [vmem:[%s716 + $0x8] sm:$0xff]
        %v1509 = vld [vmem:[%s716 + $0x10] sm:$0xff]
        %v1510 = vld [vmem:[%s716 + $0x18] sm:$0xff]
        %v1511 = vld [vmem:[%s719] sm:$0x1]
        %v1513 = vperm.slane %v1511, 0
        %v1516 = vsel %vm818, %v1505, 0
        %v1519 = vsel %vm818, %v1506, 0
        %1521 = vmatpush.msra.mxu0 0.0
        %1522 = vmatpush.msra.mxu0 0.0
        %1523 = vmatpush.msra.mxu0 0.0
        %1524 = vmatpush.msra.mxu0 0.0
        %1525 = vmatpush.msra.mxu0 0.0
        %1526 = vmatpush.msra.mxu0 0.0
        %1527 = vmatpush.msra.mxu0 0.0
        %1528 = vmatpush.msra.mxu0 0.0
        %1529 = vmatpush.msra.mxu0 0.0
        %1530 = vmatpush.msra.mxu0 0.0
        %1531 = vmatpush.msra.mxu0 0.0
        %1532 = vmatpush.msra.mxu0 0.0
        %1533 = vmatpush.msra.mxu0 %v1510
        %1534 = vmatpush.msra.mxu0 %v1509
        %1535 = vmatpush.msra.mxu0 %v1508
        %1536 = vmatpush.msra.mxu0 %v1507
        %1537 = vmatmul.f32.gmra.mxu0 %v1516
        %v1538 = vpop.f32.mrf.mxu0
        %v1539 = vadd.f32 %v1513, %v1538
        %1540 = vmatmul.f32.gmra.mxu0 %v1519
        %v1541 = vpop.f32.mrf.mxu0
        %v1542 = vadd.f32 %v1513, %v1541
        %1543 = vdwg.mxu0
        %v1544 = vmul.f32 %v1539, %v1539
        %v1545 = vmul.f32 %v1542, %v1542
        %v1546 = vmul.f32 %v1539, %v1544
        %v1547 = vmul.f32 %v1542, %v1545
        %v1548 = vmul.f32 %v1546, 0.044715
        %v1549 = vmul.f32 %v1547, 0.044715
        %v1550 = vadd.f32 %v1539, %v1548
        %v1551 = vadd.f32 %v1542, %v1549
        %v1552 = vmul.f32 %v1550, 0.7978846
        %v1553 = vmul.f32 %v1551, 0.7978846
        %v1554 = vtanh.pop %v1552
        %v1555 = vtanh.pop %v1553
        %v1556 = vadd.f32 %v1554, 1.0
        %v1557 = vadd.f32 %v1555, 1.0
        %v1558 = vmul.f32 %v1556, 0.5
        %v1559 = vmul.f32 %v1557, 0.5
        %v1560 = vmul.f32 %v1539, %v1558
        %v1561 = vmul.f32 %v1542, %v1559
        %v1562 = vld [vmem:[%s724] sm:$0xff]
        %v1563 = vld [vmem:[%s724 + $0x8] sm:$0xff]
        %v1564 = vld [vmem:[%s724 + $0x10] sm:$0xff]
        %v1565 = vld [vmem:[%s724 + $0x18] sm:$0xff]
        %v1566 = vld [vmem:[%s724 + $0x20] sm:$0xff]
        %v1567 = vld [vmem:[%s724 + $0x28] sm:$0xff]
        %v1568 = vld [vmem:[%s724 + $0x30] sm:$0xff]
        %v1569 = vld [vmem:[%s724 + $0x38] sm:$0xff]
        %v1570 = vld [vmem:[%s727] sm:$0x1]
        %v1572 = vperm.slane %v1570, 0
        %vm1574 = vcmask 523264
        %v1576 = vsel %vm1574, %v1560, 0
        %v1579 = vsel %vm1574, %v1561, 0
        %1581 = vmatpush.msra.mxu0 0.0
        %1582 = vmatpush.msra.mxu0 0.0
        %1583 = vmatpush.msra.mxu0 0.0
        %1584 = vmatpush.msra.mxu0 0.0
        %1585 = vmatpush.msra.mxu0 0.0
        %1586 = vmatpush.msra.mxu0 0.0
        %1587 = vmatpush.msra.mxu0 0.0
        %1588 = vmatpush.msra.mxu0 0.0
        %1589 = vmatpush.msra.mxu0 %v1569
        %1590 = vmatpush.msra.mxu0 %v1568
        %1591 = vmatpush.msra.mxu0 %v1567
        %1592 = vmatpush.msra.mxu0 %v1566
        %1593 = vmatpush.msra.mxu0 %v1565
        %1594 = vmatpush.msra.mxu0 %v1564
        %1595 = vmatpush.msra.mxu0 %v1563
        %1596 = vmatpush.msra.mxu0 %v1562
        %1597 = vmatmul.f32.gmra.mxu0 %v1576
        %v1598 = vpop.f32.mrf.mxu0
        %v1599 = vadd.f32 %v1572, %v1598
        %1600 = vmatmul.f32.gmra.mxu0 %v1579
        %v1601 = vpop.f32.mrf.mxu0
        %v1602 = vadd.f32 %v1572, %v1601
        %1603 = vdwg.mxu0
        %v1604 = vadd.f32 %v1599, %v1505
        %v1605 = vadd.f32 %v1602, %v1506
        %v1606 = vld [vmem:[%s730] sm:$0x1]
        %v1607 = vld [vmem:[%s733] sm:$0x1]
        %v1608 = vsel %vm818, %v1604, 0.0
        %1609 = vadd.xlane.f32.xlu0 %v1608
        %v1610 = vpop.xlane.xlu0 %1609
        %v1611 = vsel %vm818, %v1605, 0.0
        %1612 = vadd.xlane.f32.xlu0 %v1611
        %v1613 = vpop.xlane.xlu0 %1612
        %v1614 = vmul.f32 %v1610, %v1458
        %v1615 = vmul.f32 %v1613, %v1458
        %v1616 = vsub.f32 %v1604, %v1614
        %v1617 = vsub.f32 %v1605, %v1615
        %v1618 = vmul.f32 %v1616, %v1616
        %v1619 = vmul.f32 %v1617, %v1617
        %v1620 = vsel %vm818, %v1618, 0.0
        %1621 = vadd.xlane.f32.xlu0 %v1620
        %v1622 = vpop.xlane.xlu0 %1621
        %v1623 = vsel %vm818, %v1619, 0.0
        %1624 = vadd.xlane.f32.xlu0 %v1623
        %v1625 = vpop.xlane.xlu0 %1624
        %v1626 = vmul.f32 %v1622, %v1458
        %v1627 = vmul.f32 %v1625, %v1458
        %v1628 = vadd.f32 %v1626, 1e-12
        %v1629 = vadd.f32 %v1627, 1e-12
        %v1630 = vrsqrt.pop %v1628
        %v1631 = vmul.f32 %v1630, %v1628
        %v1632 = vmul.f32 %v1631, %v1630
        %v1633 = vmul.f32 0.5, %v1632
        %v1634 = vsub.f32 1.5, %v1633
        %v1635 = vmul.f32 %v1630, %v1634
        %vm1636 = vweird.f32 %v1628
        %vm1637 = vweird.f32 %v1630
        %vm1638 = vmor %vm1636, %vm1637
        %v1639 = vsel %vm1638, %v1630, %v1635
        %v1640 = vrsqrt.pop %v1629
        %v1641 = vmul.f32 %v1640, %v1629
        %v1642 = vmul.f32 %v1641, %v1640
        %v1643 = vmul.f32 0.5, %v1642
        %v1644 = vsub.f32 1.5, %v1643
        %v1645 = vmul.f32 %v1640, %v1644
        %vm1646 = vweird.f32 %v1629
        %vm1647 = vweird.f32 %v1640
        %vm1648 = vmor %vm1646, %vm1647
        %v1649 = vsel %vm1648, %v1640, %v1645
        %v1650 = vmul.f32 %v1616, %v1639
        %v1651 = vmul.f32 %v1617, %v1649
        %v1653 = vperm.slane %v1606, 0
        %v1655 = vmul.f32 %v1650, %v1653
        %v1656 = vmul.f32 %v1651, %v1653
        %v1658 = vperm.slane %v1607, 0
        %v1660 = vadd.f32 %v1655, %v1658
        %v1661 = vadd.f32 %v1656, %v1658
        %1662 = vst.msk [vmem:[#allocation2] sm:$0xff] %vm818, %v1660
        %1663 = vst.msk [vmem:[#allocation2 + $0x8] sm:$0xff] %vm818, %v1661
        %p1664 = scmp.eq.s32.totalorder %s30, 1
        // Predicated region
        $region97: #{smiles_classifier_forward.1} parent=91 // pred_check
          %p1665 = pneg %p1664
        $region98: #{smiles_classifier_forward.1} parent=91 // pred_check_branch
          %1667 = sbr.rel (%p1665) target = $region100
        $region99: #{smiles_classifier_forward.1} parent=91 // pred_region
          %v1668 = vld [vmem:[%s16] sm:$0xff]
          %v1669 = vld [vmem:[%s16 + $0x8] sm:$0xff]
          %v1670 = vld [vmem:[%s16 + $0x10] sm:$0xff]
          %v1671 = vld [vmem:[%s16 + $0x18] sm:$0xff]
          %v1672 = vld [vmem:[%s17] sm:$0x1]
          %v1674 = vperm.slane %v1672, 0
          %v1678 = vrot.slane %v1661, 7
          %vm1679 = vcmask 1041409
          %v1680 = vsel %vm1679, %v1678, %v1660
          %v1681 = vsel %vm818, %v1680, 0
          %1683 = vmatpush.msra.mxu0 0.0
          %1684 = vmatpush.msra.mxu0 0.0
          %1685 = vmatpush.msra.mxu0 0.0
          %1686 = vmatpush.msra.mxu0 0.0
          %1687 = vmatpush.msra.mxu0 0.0
          %1688 = vmatpush.msra.mxu0 0.0
          %1689 = vmatpush.msra.mxu0 0.0
          %1690 = vmatpush.msra.mxu0 0.0
          %1691 = vmatpush.msra.mxu0 0.0
          %1692 = vmatpush.msra.mxu0 0.0
          %1693 = vmatpush.msra.mxu0 0.0
          %1694 = vmatpush.msra.mxu0 0.0
          %1695 = vmatpush.msra.mxu0 %v1671
          %1696 = vmatpush.msra.mxu0 %v1670
          %1697 = vmatpush.msra.mxu0 %v1669
          %1698 = vmatpush.msra.mxu0 %v1668
          %1699 = vmatmul.f32.gmra.mxu0 %v1681
          %v1700 = vpop.f32.mrf.mxu0
          %v1701 = vadd.f32 %v1674, %v1700
          %1702 = vdwg.mxu0
          %1703 = vst [vmem:[#allocation3] sm:$0x3] %v1701
        $region100: #{smiles_classifier_forward.1} parent=91 // pred_fallthru
          _
        // Predicated region
        $region101: #{smiles_classifier_forward.1} parent=91 // pred_check
          %p1704 = pneg %p481
        $region102: #{smiles_classifier_forward.1} parent=91 // pred_check_branch
          %1706 = sbr.rel (%p1704) target = $region104
        $region103: #{smiles_classifier_forward.1} parent=91 // pred_region
          %1708 = vsyncadd [#allocation4], 0
          %s1710 = sshll.u32 [#allocation3], 4
          %s1711 = int_to_ptr.vmem [resolvable:$true] %s1710
          %s1712 = sshll.u32 %s18, 4
          %s1713 = int_to_ptr.hbm [resolvable:$true] %s1712
          %1715 = dma.vmem_to_hbm [thread:$0]  %s1711, 32, %s1713, [#allocation4]
        $region104: #{smiles_classifier_forward.1} parent=91 // pred_fallthru
          _
        // Predicated region
        $region105: #{smiles_classifier_forward.1} parent=91 // pred_check
          %p1716 = pneg %p481
        $region106: #{smiles_classifier_forward.1} parent=91 // pred_check_branch
          %1718 = sbr.rel (%p1716) target = $region108
        $region107: #{smiles_classifier_forward.1} parent=91 // pred_region
          %1720 = dma.done [#allocation4], 32
        $region108: #{smiles_classifier_forward.1} parent=91 // pred_fallthru
          _
      $region92: #{smiles_classifier_forward.1} parent=5 // pred_fallthru
        _
      %p1721 = scmp.le.s32.totalorder 2, %s25
      // Predicated region
      $region109: #{smiles_classifier_forward.1} parent=5 // pred_check
        %p1722 = pneg %p1721
      $region110: #{smiles_classifier_forward.1} parent=5 // pred_check_branch
        %1724 = sbr.rel (%p1722) target = $region112
      $region111: #{smiles_classifier_forward.1} parent=5 // pred_region
        %s1725 = ssub.s32 %s25, 2
      $region112: #{smiles_classifier_forward.1} parent=5 // pred_fallthru
        _
    $region6: #{smiles_classifier_forward.1} parent=1 // loop_footer
      %s29 = sadd.s32 1, %s25
    $region7: #{smiles_classifier_forward.1} parent=1 // loop_footer_branch
      %24 = sbr.rel target = $region3
    $region8: #{smiles_classifier_forward.1} parent=1 // loop_exit
      _
    %1726 = vsyncpa [#allocation4], 1
    %s1727 = scalar_lea.sflag [#allocation4], 1
    %1728 = vsyncpa %s1727, 1

</llo_original>
